<compile_context>
chip_gen: v6e
topology: v6e:2x2x1
jax: 0.10.0
libtpu: 0.0.40
codegen_flags: <defaults>
</compile_context>

<pallas_src>
import numpy as np

import jax
import jax.numpy as jnp
from jax.experimental import pallas as pl
from jax.experimental.pallas import tpu as pltpu


# ------------------------------ fused kernel -------------------------------

def _classic_net_kernel(p1_ref, w1_ref, b1_ref, w2_ref, b2_ref,
                        wf1_ref, bf1_ref, wf2_ref, bf2_ref, out_ref):
    # conv1 (2x2, stride 2) + relu:  lane-blocked matmul, (TB,144)@(144,144)
    h1 = jnp.dot(p1_ref[...], w1_ref[...], preferred_element_type=jnp.float32)
    h1 = jnp.maximum(h1 + b1_ref[...], 0.0)                      # (TB, 144)

    # conv2 (3x3, stride 1, pad 1) + relu: padding + taps folded into weight
    h2 = jnp.dot(h1, w2_ref[...], preferred_element_type=jnp.float32)
    h2 = jnp.maximum(h2 + b2_ref[...], 0.0)                      # (TB, 288)
    # lane layout of h2: lane = (i*6 + j) * 8 + c   with i,j in [0,6), c in [0,8)

    # 2x2/2 max-pool + fc1, fully in VMEM.  For each pooled position (ip,jp)
    # the 4 candidates are static 8-lane slices; the NCHW flatten permutation
    # is already folded into wf1_ref's (position, channel, out) layout.
    acc = None
    for t in range(9):
        ip, jp = t // 3, t % 3
        s0 = 12 * ip + 2 * jp                   # top-left spatial index
        cands = [h2[:, (s0 + d) * 8:(s0 + d + 1) * 8] for d in (0, 1, 6, 7)]
        pooled = jnp.maximum(jnp.maximum(cands[0], cands[1]),
                             jnp.maximum(cands[2], cands[3]))    # (TB, 8)
        part = jnp.dot(pooled, wf1_ref[t], preferred_element_type=jnp.float32)
        acc = part if acc is None else acc + part
    h3 = jnp.maximum(acc + bf1_ref[...], 0.0)                    # (TB, 36)

    # fc2: output lane-padded to 128 -> dense, unmasked stores
    out_ref[...] = (jnp.dot(h3, wf2_ref[...], preferred_element_type=jnp.float32)
                    + bf2_ref[...])                              # (TB, 128)


# --------------------------- host-side weight prep --------------------------

def _pack_params(params):
    """Repack PyTorch-layout weights into the fused-kernel layouts (trace time)."""
    w1, b1, w2, b2, wf1, bf1, wf2, bf2 = [p.astype(jnp.float32) for p in params]
    num_classes = wf2.shape[0]

    # conv1 as a block-diagonal (144,144) matmul over the 36 non-overlapping
    # 2x2 patches.  Patch lane order is (kh, kw) to match OIHW weights.
    w1m = w1.reshape(4, 1 * 2 * 2).T                                  # (patch, cout)
    w1big = jnp.kron(jnp.eye(36, dtype=jnp.float32), w1m)             # (144, 144)
    b1big = jnp.tile(b1, 36).reshape(1, 144)

    # conv2 (3x3, stride 1, pad 1) as one (144, 288) matmul: the spatial tap
    # structure + zero padding is a constant 0/1 scatter tensor S.
    S = np.zeros((9, 36, 36), np.float32)        # (tap, s_in, s_out)
    for i in range(6):
        for j in range(6):
            for kh in range(3):
                for kw in range(3):
                    ii, jj = i + kh - 1, j + kw - 1
                    if 0 <= ii < 6 and 0 <= jj < 6:
                        S[kh * 3 + kw, ii * 6 + jj, i * 6 + j] = 1.0
    w2tap = w2.transpose(2, 3, 1, 0).reshape(9, 4, 8)                 # (tap, cin, cout)
    w2big = jnp.einsum("tio,tcd->icod", jnp.asarray(S), w2tap).reshape(144, 288)
    b2big = jnp.tile(b2, 36).reshape(1, 288)

    # fc1: fold the PyTorch NCHW flatten (c*9 + ip*3 + jp) into the weight
    # layout -> (position, channel, out), so no activation permute in-kernel.
    wf1r = wf1.reshape(36, 8, 9).transpose(2, 1, 0)                   # (9, 8, 36)
    bf1r = bf1.reshape(1, 36)

    # fc2: pad the output dimension to 128 lanes for dense stores.
    wf2p = jnp.zeros((36, 128), jnp.float32).at[:, :num_classes].set(wf2.T)
    bf2p = jnp.zeros((1, 128), jnp.float32).at[:, :num_classes].set(bf2)

    return (w1big, b1big, w2big, b2big, wf1r, bf1r, wf2p, bf2p), num_classes


# ------------------------------- forward pass -------------------------------

def classic_net_forward(x, params, *, batch_tile=128):
    """x: (B, 1, 12, 12) NCHW float32 -> logits (B, num_classes)."""
    B = x.shape[0]
    assert x.shape[1:] == (1, 12, 12), "module implies 1x12x12 input"
    packed, num_classes = _pack_params(params)
    w1big, b1big, w2big, b2big, wf1r, bf1r, wf2p, bf2p = packed

    # conv1 im2col (non-overlapping 2x2 patches): pure layout glue on the
    # input only.  Lane order = (spatial, kh, kw), matching w1big.
    p1 = (x.astype(jnp.float32)
           .reshape(B, 6, 2, 6, 2)
           .transpose(0, 1, 3, 2, 4)
           .reshape(B, 144))

    # Batch tiling: biggest tile that keeps things simple; pad B if needed so
    # the grid evenly divides (padded rows are sliced off afterwards).
    tb = B if B <= batch_tile else batch_tile
    Bp = ((B + tb - 1) // tb) * tb
    if Bp != B:
        p1 = jnp.pad(p1, ((0, Bp - B), (0, 0)))
    nb = Bp // tb

    out = pl.pallas_call(
        _classic_net_kernel,
        out_shape=jax.ShapeDtypeStruct((Bp, 128), jnp.float32),
        grid=(nb,),
        in_specs=[
            pl.BlockSpec((tb, 144), lambda i: (i, 0)),        # conv1 patches
            pl.BlockSpec((144, 144), lambda i: (0, 0)),       # conv1 weight
            pl.BlockSpec((1, 144), lambda i: (0, 0)),         # conv1 bias
            pl.BlockSpec((144, 288), lambda i: (0, 0)),       # conv2 weight
            pl.BlockSpec((1, 288), lambda i: (0, 0)),         # conv2 bias
            pl.BlockSpec((9, 8, 36), lambda i: (0, 0, 0)),    # fc1 weight (per pos)
            pl.BlockSpec((1, 36), lambda i: (0, 0)),          # fc1 bias
            pl.BlockSpec((36, 128), lambda i: (0, 0)),        # fc2 weight (padded)
            pl.BlockSpec((1, 128), lambda i: (0, 0)),         # fc2 bias (padded)
        ],
        out_specs=pl.BlockSpec((tb, 128), lambda i: (i, 0)),
        compiler_params=pltpu.CompilerParams(
            dimension_semantics=("parallel",)),
    )(p1, w1big, b1big, w2big, b2big, wf1r, bf1r, wf2p, bf2p)

    return out[:B, :num_classes]


# ---------------------------- pure-JAX reference ----------------------------

def reference_forward(x, params):
    w1, b1, w2, b2, wf1, bf1, wf2, bf2 = params
    y = jax.lax.conv_general_dilated(
        x, w1, window_strides=(2, 2), padding="VALID",
        dimension_numbers=("NCHW", "OIHW", "NCHW"))
    y = jax.nn.relu(y + b1[None, :, None, None])
    y = jax.lax.conv_general_dilated(
        y, w2, window_strides=(1, 1), padding=((1, 1), (1, 1)),
        dimension_numbers=("NCHW", "OIHW", "NCHW"))
    y = jax.nn.relu(y + b2[None, :, None, None])
    B, C, H, W = y.shape
    y = y.reshape(B, C, H // 2, 2, W // 2, 2).max(axis=(3, 5))
    y = y.reshape(B, -1)
    y = jax.nn.relu(y @ wf1.T + bf1)
    y = y @ wf2.T + bf2
    return y


# ----------------------------------- main ------------------------------------

def init_params(key, num_classes=10):
    ks = jax.random.split(key, 8)

    def rnd(k, shape, fan_in):
        return jax.random.normal(k, shape, jnp.float32) / jnp.sqrt(fan_in)

    w1 = rnd(ks[0], (4, 1, 2, 2), 1 * 2 * 2)
    b1 = rnd(ks[1], (4,), 4.0)
    w2 = rnd(ks[2], (8, 4, 3, 3), 4 * 3 * 3)
    b2 = rnd(ks[3], (8,), 8.0)
    wf1 = rnd(ks[4], (36, 72), 72.0)
    bf1 = rnd(ks[5], (36,), 36.0)
    wf2 = rnd(ks[6], (num_classes, 36), 36.0)
    bf2 = rnd(ks[7], (num_classes,), float(num_classes))
    return (w1, b1, w2, b2, wf1, bf1, wf2, bf2)


if __name__ == "__main__":
    key = jax.random.PRNGKey(0)
    kx, kp = jax.random.split(key)
    params = init_params(kp, num_classes=10)

    B = 2
    x = jax.random.normal(kx, (B, 1, 12, 12), jnp.float32)   # NCHW, like PyTorch

    out = jax.jit(classic_net_forward)(x, params)
    out = jax.block_until_ready(out)
    assert out.shape == (B, 10)

    ref = reference_forward(x, params)
    assert jnp.allclose(out, ref, atol=1e-3, rtol=1e-3), (
        f"mismatch: max abs err {jnp.max(jnp.abs(out - ref))}")

    print("KERNEL_OK")
</pallas_src>

<mosaic_0001>
module attributes {stable_mosaic.version = 11 : i64} {
  func.func @_classic_net_kernel(%arg0: i32, %arg1: memref<2x144xf32, #tpu.memory_space<vmem>>, %arg2: memref<144x144xf32, #tpu.memory_space<vmem>>, %arg3: memref<1x144xf32, #tpu.memory_space<vmem>>, %arg4: memref<144x288xf32, #tpu.memory_space<vmem>>, %arg5: memref<1x288xf32, #tpu.memory_space<vmem>>, %arg6: memref<9x8x36xf32, #tpu.memory_space<vmem>>, %arg7: memref<1x36xf32, #tpu.memory_space<vmem>>, %arg8: memref<36x128xf32, #tpu.memory_space<vmem>>, %arg9: memref<1x128xf32, #tpu.memory_space<vmem>>, %arg10: memref<2x128xf32, #tpu.memory_space<vmem>>) attributes {dimension_semantics = [#tpu.dimension_semantics<parallel>], iteration_bounds = array<i64: 1>, scalar_prefetch = 0 : i64, scratch_operands = 0 : i64, tpu.core_type = #tpu.core_type<tc>, window_params = [{transform_indices = @transform_0, window_bounds = array<i64: 2, 144>}, {pipeline_mode = #tpu.pipeline_mode<synchronous>, transform_indices = @transform_1, window_bounds = array<i64: 144, 144>}, {pipeline_mode = #tpu.pipeline_mode<synchronous>, transform_indices = @transform_2, window_bounds = array<i64: 1, 144>}, {pipeline_mode = #tpu.pipeline_mode<synchronous>, transform_indices = @transform_3, window_bounds = array<i64: 144, 288>}, {pipeline_mode = #tpu.pipeline_mode<synchronous>, transform_indices = @transform_4, window_bounds = array<i64: 1, 288>}, {pipeline_mode = #tpu.pipeline_mode<synchronous>, transform_indices = @transform_5, window_bounds = array<i64: 9, 8, 36>}, {pipeline_mode = #tpu.pipeline_mode<synchronous>, transform_indices = @transform_6, window_bounds = array<i64: 1, 36>}, {pipeline_mode = #tpu.pipeline_mode<synchronous>, transform_indices = @transform_7, window_bounds = array<i64: 36, 128>}, {pipeline_mode = #tpu.pipeline_mode<synchronous>, transform_indices = @transform_8, window_bounds = array<i64: 1, 128>}, {transform_indices = @transform_9, window_bounds = array<i64: 2, 128>}]} {
    %c0 = arith.constant 0 : index
    %c0_0 = arith.constant 0 : index
    %0 = vector.load %arg1[%c0, %c0_0] : memref<2x144xf32, #tpu.memory_space<vmem>>, vector<2x144xf32>
    %c0_1 = arith.constant 0 : index
    %c0_2 = arith.constant 0 : index
    %1 = vector.load %arg2[%c0_1, %c0_2] : memref<144x144xf32, #tpu.memory_space<vmem>>, vector<144x144xf32>
    %cst = arith.constant dense<0.000000e+00> : vector<2x144xf32>
    %2 = tpu.matmul %0, %1, %cst {dimension_numbers = #tpu.dot_dimension_numbers<[1], [0], [0], [1], [0, 0, 1, 1], [], []>} : vector<2x144xf32>, vector<144x144xf32>, vector<2x144xf32> -> vector<2x144xf32>
    %c0_3 = arith.constant 0 : index
    %c0_4 = arith.constant 0 : index
    %3 = vector.load %arg3[%c0_3, %c0_4] : memref<1x144xf32, #tpu.memory_space<vmem>>, vector<1x144xf32>
    %4 = vector.broadcast %3 : vector<1x144xf32> to vector<2x144xf32>
    %5 = arith.addf %2, %4 : vector<2x144xf32>
    %cst_5 = arith.constant 0.000000e+00 : f32
    %6 = vector.broadcast %cst_5 : f32 to vector<2x144xf32>
    %7 = arith.maximumf %5, %6 : vector<2x144xf32>
    %c0_6 = arith.constant 0 : index
    %c0_7 = arith.constant 0 : index
    %8 = vector.load %arg4[%c0_6, %c0_7] : memref<144x288xf32, #tpu.memory_space<vmem>>, vector<144x288xf32>
    %cst_8 = arith.constant dense<0.000000e+00> : vector<2x288xf32>
    %9 = tpu.matmul %7, %8, %cst_8 {dimension_numbers = #tpu.dot_dimension_numbers<[1], [0], [0], [1], [0, 0, 1, 1], [], []>} : vector<2x144xf32>, vector<144x288xf32>, vector<2x288xf32> -> vector<2x288xf32>
    %c0_9 = arith.constant 0 : index
    %c0_10 = arith.constant 0 : index
    %10 = vector.load %arg5[%c0_9, %c0_10] : memref<1x288xf32, #tpu.memory_space<vmem>>, vector<1x288xf32>
    %11 = vector.broadcast %10 : vector<1x288xf32> to vector<2x288xf32>
    %12 = arith.addf %9, %11 : vector<2x288xf32>
    %cst_11 = arith.constant 0.000000e+00 : f32
    %13 = vector.broadcast %cst_11 : f32 to vector<2x288xf32>
    %14 = arith.maximumf %12, %13 : vector<2x288xf32>
    %15 = vector.extract_strided_slice %14 {offsets = [0, 0], sizes = [2, 8], strides = [1, 1]} : vector<2x288xf32> to vector<2x8xf32>
    %16 = vector.extract_strided_slice %14 {offsets = [0, 8], sizes = [2, 8], strides = [1, 1]} : vector<2x288xf32> to vector<2x8xf32>
    %17 = vector.extract_strided_slice %14 {offsets = [0, 48], sizes = [2, 8], strides = [1, 1]} : vector<2x288xf32> to vector<2x8xf32>
    %18 = vector.extract_strided_slice %14 {offsets = [0, 56], sizes = [2, 8], strides = [1, 1]} : vector<2x288xf32> to vector<2x8xf32>
    %19 = arith.maximumf %15, %16 : vector<2x8xf32>
    %20 = arith.maximumf %17, %18 : vector<2x8xf32>
    %21 = arith.maximumf %19, %20 : vector<2x8xf32>
    %c0_12 = arith.constant 0 : index
    %c0_13 = arith.constant 0 : index
    %c0_14 = arith.constant 0 : index
    %22 = vector.load %arg6[%c0_12, %c0_13, %c0_14] : memref<9x8x36xf32, #tpu.memory_space<vmem>>, vector<1x8x36xf32>
    %23 = vector.shape_cast %22 : vector<1x8x36xf32> to vector<8x36xf32>
    %cst_15 = arith.constant dense<0.000000e+00> : vector<2x36xf32>
    %24 = tpu.matmul %21, %23, %cst_15 {dimension_numbers = #tpu.dot_dimension_numbers<[1], [0], [0], [1], [0, 0, 1, 1], [], []>} : vector<2x8xf32>, vector<8x36xf32>, vector<2x36xf32> -> vector<2x36xf32>
    %25 = vector.extract_strided_slice %14 {offsets = [0, 16], sizes = [2, 8], strides = [1, 1]} : vector<2x288xf32> to vector<2x8xf32>
    %26 = vector.extract_strided_slice %14 {offsets = [0, 24], sizes = [2, 8], strides = [1, 1]} : vector<2x288xf32> to vector<2x8xf32>
    %27 = vector.extract_strided_slice %14 {offsets = [0, 64], sizes = [2, 8], strides = [1, 1]} : vector<2x288xf32> to vector<2x8xf32>
    %28 = vector.extract_strided_slice %14 {offsets = [0, 72], sizes = [2, 8], strides = [1, 1]} : vector<2x288xf32> to vector<2x8xf32>
    %29 = arith.maximumf %25, %26 : vector<2x8xf32>
    %30 = arith.maximumf %27, %28 : vector<2x8xf32>
    %31 = arith.maximumf %29, %30 : vector<2x8xf32>
    %c1 = arith.constant 1 : index
    %c0_16 = arith.constant 0 : index
    %c0_17 = arith.constant 0 : index
    %32 = vector.load %arg6[%c1, %c0_16, %c0_17] : memref<9x8x36xf32, #tpu.memory_space<vmem>>, vector<1x8x36xf32>
    %33 = vector.shape_cast %32 : vector<1x8x36xf32> to vector<8x36xf32>
    %cst_18 = arith.constant dense<0.000000e+00> : vector<2x36xf32>
    %34 = tpu.matmul %31, %33, %cst_18 {dimension_numbers = #tpu.dot_dimension_numbers<[1], [0], [0], [1], [0, 0, 1, 1], [], []>} : vector<2x8xf32>, vector<8x36xf32>, vector<2x36xf32> -> vector<2x36xf32>
    %35 = arith.addf %24, %34 : vector<2x36xf32>
    %36 = vector.extract_strided_slice %14 {offsets = [0, 32], sizes = [2, 8], strides = [1, 1]} : vector<2x288xf32> to vector<2x8xf32>
    %37 = vector.extract_strided_slice %14 {offsets = [0, 40], sizes = [2, 8], strides = [1, 1]} : vector<2x288xf32> to vector<2x8xf32>
    %38 = vector.extract_strided_slice %14 {offsets = [0, 80], sizes = [2, 8], strides = [1, 1]} : vector<2x288xf32> to vector<2x8xf32>
    %39 = vector.extract_strided_slice %14 {offsets = [0, 88], sizes = [2, 8], strides = [1, 1]} : vector<2x288xf32> to vector<2x8xf32>
    %40 = arith.maximumf %36, %37 : vector<2x8xf32>
    %41 = arith.maximumf %38, %39 : vector<2x8xf32>
    %42 = arith.maximumf %40, %41 : vector<2x8xf32>
    %c2 = arith.constant 2 : index
    %c0_19 = arith.constant 0 : index
    %c0_20 = arith.constant 0 : index
    %43 = vector.load %arg6[%c2, %c0_19, %c0_20] : memref<9x8x36xf32, #tpu.memory_space<vmem>>, vector<1x8x36xf32>
    %44 = vector.shape_cast %43 : vector<1x8x36xf32> to vector<8x36xf32>
    %cst_21 = arith.constant dense<0.000000e+00> : vector<2x36xf32>
    %45 = tpu.matmul %42, %44, %cst_21 {dimension_numbers = #tpu.dot_dimension_numbers<[1], [0], [0], [1], [0, 0, 1, 1], [], []>} : vector<2x8xf32>, vector<8x36xf32>, vector<2x36xf32> -> vector<2x36xf32>
    %46 = arith.addf %35, %45 : vector<2x36xf32>
    %47 = vector.extract_strided_slice %14 {offsets = [0, 96], sizes = [2, 8], strides = [1, 1]} : vector<2x288xf32> to vector<2x8xf32>
    %48 = vector.extract_strided_slice %14 {offsets = [0, 104], sizes = [2, 8], strides = [1, 1]} : vector<2x288xf32> to vector<2x8xf32>
    %49 = vector.extract_strided_slice %14 {offsets = [0, 144], sizes = [2, 8], strides = [1, 1]} : vector<2x288xf32> to vector<2x8xf32>
    %50 = vector.extract_strided_slice %14 {offsets = [0, 152], sizes = [2, 8], strides = [1, 1]} : vector<2x288xf32> to vector<2x8xf32>
    %51 = arith.maximumf %47, %48 : vector<2x8xf32>
    %52 = arith.maximumf %49, %50 : vector<2x8xf32>
    %53 = arith.maximumf %51, %52 : vector<2x8xf32>
    %c3 = arith.constant 3 : index
    %c0_22 = arith.constant 0 : index
    %c0_23 = arith.constant 0 : index
    %54 = vector.load %arg6[%c3, %c0_22, %c0_23] : memref<9x8x36xf32, #tpu.memory_space<vmem>>, vector<1x8x36xf32>
    %55 = vector.shape_cast %54 : vector<1x8x36xf32> to vector<8x36xf32>
    %cst_24 = arith.constant dense<0.000000e+00> : vector<2x36xf32>
    %56 = tpu.matmul %53, %55, %cst_24 {dimension_numbers = #tpu.dot_dimension_numbers<[1], [0], [0], [1], [0, 0, 1, 1], [], []>} : vector<2x8xf32>, vector<8x36xf32>, vector<2x36xf32> -> vector<2x36xf32>
    %57 = arith.addf %46, %56 : vector<2x36xf32>
    %58 = vector.extract_strided_slice %14 {offsets = [0, 112], sizes = [2, 8], strides = [1, 1]} : vector<2x288xf32> to vector<2x8xf32>
    %59 = vector.extract_strided_slice %14 {offsets = [0, 120], sizes = [2, 8], strides = [1, 1]} : vector<2x288xf32> to vector<2x8xf32>
    %60 = vector.extract_strided_slice %14 {offsets = [0, 160], sizes = [2, 8], strides = [1, 1]} : vector<2x288xf32> to vector<2x8xf32>
    %61 = vector.extract_strided_slice %14 {offsets = [0, 168], sizes = [2, 8], strides = [1, 1]} : vector<2x288xf32> to vector<2x8xf32>
    %62 = arith.maximumf %58, %59 : vector<2x8xf32>
    %63 = arith.maximumf %60, %61 : vector<2x8xf32>
    %64 = arith.maximumf %62, %63 : vector<2x8xf32>
    %c4 = arith.constant 4 : index
    %c0_25 = arith.constant 0 : index
    %c0_26 = arith.constant 0 : index
    %65 = vector.load %arg6[%c4, %c0_25, %c0_26] : memref<9x8x36xf32, #tpu.memory_space<vmem>>, vector<1x8x36xf32>
    %66 = vector.shape_cast %65 : vector<1x8x36xf32> to vector<8x36xf32>
    %cst_27 = arith.constant dense<0.000000e+00> : vector<2x36xf32>
    %67 = tpu.matmul %64, %66, %cst_27 {dimension_numbers = #tpu.dot_dimension_numbers<[1], [0], [0], [1], [0, 0, 1, 1], [], []>} : vector<2x8xf32>, vector<8x36xf32>, vector<2x36xf32> -> vector<2x36xf32>
    %68 = arith.addf %57, %67 : vector<2x36xf32>
    %69 = vector.extract_strided_slice %14 {offsets = [0, 128], sizes = [2, 8], strides = [1, 1]} : vector<2x288xf32> to vector<2x8xf32>
    %70 = vector.extract_strided_slice %14 {offsets = [0, 136], sizes = [2, 8], strides = [1, 1]} : vector<2x288xf32> to vector<2x8xf32>
    %71 = vector.extract_strided_slice %14 {offsets = [0, 176], sizes = [2, 8], strides = [1, 1]} : vector<2x288xf32> to vector<2x8xf32>
    %72 = vector.extract_strided_slice %14 {offsets = [0, 184], sizes = [2, 8], strides = [1, 1]} : vector<2x288xf32> to vector<2x8xf32>
    %73 = arith.maximumf %69, %70 : vector<2x8xf32>
    %74 = arith.maximumf %71, %72 : vector<2x8xf32>
    %75 = arith.maximumf %73, %74 : vector<2x8xf32>
    %c5 = arith.constant 5 : index
    %c0_28 = arith.constant 0 : index
    %c0_29 = arith.constant 0 : index
    %76 = vector.load %arg6[%c5, %c0_28, %c0_29] : memref<9x8x36xf32, #tpu.memory_space<vmem>>, vector<1x8x36xf32>
    %77 = vector.shape_cast %76 : vector<1x8x36xf32> to vector<8x36xf32>
    %cst_30 = arith.constant dense<0.000000e+00> : vector<2x36xf32>
    %78 = tpu.matmul %75, %77, %cst_30 {dimension_numbers = #tpu.dot_dimension_numbers<[1], [0], [0], [1], [0, 0, 1, 1], [], []>} : vector<2x8xf32>, vector<8x36xf32>, vector<2x36xf32> -> vector<2x36xf32>
    %79 = arith.addf %68, %78 : vector<2x36xf32>
    %80 = vector.extract_strided_slice %14 {offsets = [0, 192], sizes = [2, 8], strides = [1, 1]} : vector<2x288xf32> to vector<2x8xf32>
    %81 = vector.extract_strided_slice %14 {offsets = [0, 200], sizes = [2, 8], strides = [1, 1]} : vector<2x288xf32> to vector<2x8xf32>
    %82 = vector.extract_strided_slice %14 {offsets = [0, 240], sizes = [2, 8], strides = [1, 1]} : vector<2x288xf32> to vector<2x8xf32>
    %83 = vector.extract_strided_slice %14 {offsets = [0, 248], sizes = [2, 8], strides = [1, 1]} : vector<2x288xf32> to vector<2x8xf32>
    %84 = arith.maximumf %80, %81 : vector<2x8xf32>
    %85 = arith.maximumf %82, %83 : vector<2x8xf32>
    %86 = arith.maximumf %84, %85 : vector<2x8xf32>
    %c6 = arith.constant 6 : index
    %c0_31 = arith.constant 0 : index
    %c0_32 = arith.constant 0 : index
    %87 = vector.load %arg6[%c6, %c0_31, %c0_32] : memref<9x8x36xf32, #tpu.memory_space<vmem>>, vector<1x8x36xf32>
    %88 = vector.shape_cast %87 : vector<1x8x36xf32> to vector<8x36xf32>
    %cst_33 = arith.constant dense<0.000000e+00> : vector<2x36xf32>
    %89 = tpu.matmul %86, %88, %cst_33 {dimension_numbers = #tpu.dot_dimension_numbers<[1], [0], [0], [1], [0, 0, 1, 1], [], []>} : vector<2x8xf32>, vector<8x36xf32>, vector<2x36xf32> -> vector<2x36xf32>
    %90 = arith.addf %79, %89 : vector<2x36xf32>
    %91 = vector.extract_strided_slice %14 {offsets = [0, 208], sizes = [2, 8], strides = [1, 1]} : vector<2x288xf32> to vector<2x8xf32>
    %92 = vector.extract_strided_slice %14 {offsets = [0, 216], sizes = [2, 8], strides = [1, 1]} : vector<2x288xf32> to vector<2x8xf32>
    %93 = vector.extract_strided_slice %14 {offsets = [0, 256], sizes = [2, 8], strides = [1, 1]} : vector<2x288xf32> to vector<2x8xf32>
    %94 = vector.extract_strided_slice %14 {offsets = [0, 264], sizes = [2, 8], strides = [1, 1]} : vector<2x288xf32> to vector<2x8xf32>
    %95 = arith.maximumf %91, %92 : vector<2x8xf32>
    %96 = arith.maximumf %93, %94 : vector<2x8xf32>
    %97 = arith.maximumf %95, %96 : vector<2x8xf32>
    %c7 = arith.constant 7 : index
    %c0_34 = arith.constant 0 : index
    %c0_35 = arith.constant 0 : index
    %98 = vector.load %arg6[%c7, %c0_34, %c0_35] : memref<9x8x36xf32, #tpu.memory_space<vmem>>, vector<1x8x36xf32>
    %99 = vector.shape_cast %98 : vector<1x8x36xf32> to vector<8x36xf32>
    %cst_36 = arith.constant dense<0.000000e+00> : vector<2x36xf32>
    %100 = tpu.matmul %97, %99, %cst_36 {dimension_numbers = #tpu.dot_dimension_numbers<[1], [0], [0], [1], [0, 0, 1, 1], [], []>} : vector<2x8xf32>, vector<8x36xf32>, vector<2x36xf32> -> vector<2x36xf32>
    %101 = arith.addf %90, %100 : vector<2x36xf32>
    %102 = vector.extract_strided_slice %14 {offsets = [0, 224], sizes = [2, 8], strides = [1, 1]} : vector<2x288xf32> to vector<2x8xf32>
    %103 = vector.extract_strided_slice %14 {offsets = [0, 232], sizes = [2, 8], strides = [1, 1]} : vector<2x288xf32> to vector<2x8xf32>
    %104 = vector.extract_strided_slice %14 {offsets = [0, 272], sizes = [2, 8], strides = [1, 1]} : vector<2x288xf32> to vector<2x8xf32>
    %105 = vector.extract_strided_slice %14 {offsets = [0, 280], sizes = [2, 8], strides = [1, 1]} : vector<2x288xf32> to vector<2x8xf32>
    %106 = arith.maximumf %102, %103 : vector<2x8xf32>
    %107 = arith.maximumf %104, %105 : vector<2x8xf32>
    %108 = arith.maximumf %106, %107 : vector<2x8xf32>
    %c8 = arith.constant 8 : index
    %c0_37 = arith.constant 0 : index
    %c0_38 = arith.constant 0 : index
    %109 = vector.load %arg6[%c8, %c0_37, %c0_38] : memref<9x8x36xf32, #tpu.memory_space<vmem>>, vector<1x8x36xf32>
    %110 = vector.shape_cast %109 : vector<1x8x36xf32> to vector<8x36xf32>
    %cst_39 = arith.constant dense<0.000000e+00> : vector<2x36xf32>
    %111 = tpu.matmul %108, %110, %cst_39 {dimension_numbers = #tpu.dot_dimension_numbers<[1], [0], [0], [1], [0, 0, 1, 1], [], []>} : vector<2x8xf32>, vector<8x36xf32>, vector<2x36xf32> -> vector<2x36xf32>
    %112 = arith.addf %101, %111 : vector<2x36xf32>
    %c0_40 = arith.constant 0 : index
    %c0_41 = arith.constant 0 : index
    %113 = vector.load %arg7[%c0_40, %c0_41] : memref<1x36xf32, #tpu.memory_space<vmem>>, vector<1x36xf32>
    %114 = vector.broadcast %113 : vector<1x36xf32> to vector<2x36xf32>
    %115 = arith.addf %112, %114 : vector<2x36xf32>
    %cst_42 = arith.constant 0.000000e+00 : f32
    %116 = vector.broadcast %cst_42 : f32 to vector<2x36xf32>
    %117 = arith.maximumf %115, %116 : vector<2x36xf32>
    %c0_43 = arith.constant 0 : index
    %c0_44 = arith.constant 0 : index
    %118 = vector.load %arg8[%c0_43, %c0_44] : memref<36x128xf32, #tpu.memory_space<vmem>>, vector<36x128xf32>
    %cst_45 = arith.constant dense<0.000000e+00> : vector<2x128xf32>
    %119 = tpu.matmul %117, %118, %cst_45 {dimension_numbers = #tpu.dot_dimension_numbers<[1], [0], [0], [1], [0, 0, 1, 1], [], []>} : vector<2x36xf32>, vector<36x128xf32>, vector<2x128xf32> -> vector<2x128xf32>
    %c0_46 = arith.constant 0 : index
    %c0_47 = arith.constant 0 : index
    %120 = vector.load %arg9[%c0_46, %c0_47] : memref<1x128xf32, #tpu.memory_space<vmem>>, vector<1x128xf32>
    %121 = vector.broadcast %120 : vector<1x128xf32> to vector<2x128xf32>
    %122 = arith.addf %119, %121 : vector<2x128xf32>
    %c0_48 = arith.constant 0 : index
    %c0_49 = arith.constant 0 : index
    %123 = vector.load %arg10[%c0_48, %c0_49] : memref<2x128xf32, #tpu.memory_space<vmem>>, vector<2x128xf32>
    tpu.vector_store %arg10[%c0_48, %c0_49], %122 {strides = array<i32>} : memref<2x128xf32, #tpu.memory_space<vmem>>, vector<2x128xf32>,
    return
  }
  func.func @transform_0(%arg0: i32) -> (i32, i32) {
    %c0_i32 = arith.constant 0 : i32
    %c0_i32_0 = arith.constant 0 : i32
    return %arg0, %c0_i32 : i32, i32
  }
  func.func @transform_1(%arg0: i32) -> (i32, i32) {
    %c0_i32 = arith.constant 0 : i32
    %c0_i32_0 = arith.constant 0 : i32
    %c0_i32_1 = arith.constant 0 : i32
    return %c0_i32, %c0_i32_0 : i32, i32
  }
  func.func @transform_2(%arg0: i32) -> (i32, i32) {
    %c0_i32 = arith.constant 0 : i32
    %c0_i32_0 = arith.constant 0 : i32
    %c0_i32_1 = arith.constant 0 : i32
    return %c0_i32, %c0_i32_0 : i32, i32
  }
  func.func @transform_3(%arg0: i32) -> (i32, i32) {
    %c0_i32 = arith.constant 0 : i32
    %c0_i32_0 = arith.constant 0 : i32
    %c0_i32_1 = arith.constant 0 : i32
    return %c0_i32, %c0_i32_0 : i32, i32
  }
  func.func @transform_4(%arg0: i32) -> (i32, i32) {
    %c0_i32 = arith.constant 0 : i32
    %c0_i32_0 = arith.constant 0 : i32
    %c0_i32_1 = arith.constant 0 : i32
    return %c0_i32, %c0_i32_0 : i32, i32
  }
  func.func @transform_5(%arg0: i32) -> (i32, i32, i32) {
    %c0_i32 = arith.constant 0 : i32
    %c0_i32_0 = arith.constant 0 : i32
    %c0_i32_1 = arith.constant 0 : i32
    %c0_i32_2 = arith.constant 0 : i32
    return %c0_i32, %c0_i32_0, %c0_i32_1 : i32, i32, i32
  }
  func.func @transform_6(%arg0: i32) -> (i32, i32) {
    %c0_i32 = arith.constant 0 : i32
    %c0_i32_0 = arith.constant 0 : i32
    %c0_i32_1 = arith.constant 0 : i32
    return %c0_i32, %c0_i32_0 : i32, i32
  }
  func.func @transform_7(%arg0: i32) -> (i32, i32) {
    %c0_i32 = arith.constant 0 : i32
    %c0_i32_0 = arith.constant 0 : i32
    %c0_i32_1 = arith.constant 0 : i32
    return %c0_i32, %c0_i32_0 : i32, i32
  }
  func.func @transform_8(%arg0: i32) -> (i32, i32) {
    %c0_i32 = arith.constant 0 : i32
    %c0_i32_0 = arith.constant 0 : i32
    %c0_i32_1 = arith.constant 0 : i32
    return %c0_i32, %c0_i32_0 : i32, i32
  }
  func.func @transform_9(%arg0: i32) -> (i32, i32) {
    %c0_i32 = arith.constant 0 : i32
    %c0_i32_0 = arith.constant 0 : i32
    return %arg0, %c0_i32 : i32, i32
  }
}

</mosaic_0001>

<llo_original>
// kernel: tile.18
$region0: #{tile.18}
  #allocation0 [shape = 's32[1]{0}', space=sflag, size = 0x4, scoped, tag = 'scoped memory for tile.18']
  %s0 = inlined_call_operand.vmem [shape: f32[8], index: 0, kind: input, shape index: {}]
  %s1 = inlined_call_operand.vmem [shape: f32[36,8], index: 1, kind: output, shape index: {}]
  // Predicated region
  $region2: #{tile.18} parent=0 // pred_check
    _
  $region3: #{tile.18} parent=0 // pred_check_branch
    %3 = sbr.rel (0) target = $region5
  $region4: #{tile.18} parent=0 // pred_region
    _
  $region5: #{tile.18} parent=0 // pred_fallthru
    _
  %v4 = vld [vmem:[%s0] ss:$0 sm:$0xff]
  %5 = vst [vmem:[%s1] sm:$0xff] %v4
  %s6 = scalar_lea.vmem %s1, 8
  %7 = vst [vmem:[%s6] sm:$0xff] %v4
  %s8 = scalar_lea.vmem %s1, 16
  %9 = vst [vmem:[%s8] sm:$0xff] %v4
  %s10 = scalar_lea.vmem %s1, 24
  %11 = vst [vmem:[%s10] sm:$0xff] %v4
  %s12 = scalar_lea.vmem %s1, 32
  %13 = vst [vmem:[%s12] sm:$0xff] %v4

// kernel: tile.19
$region0: #{tile.19}
  %s0 = inlined_call_operand.vmem [shape: f32[36,8], index: 0, kind: input, shape index: {}]
  %s1 = inlined_call_operand.vmem [shape: f32[1,288], index: 1, kind: output, shape index: {}]
  $region1: #{tile.19} parent=0
    #allocation0 [shape = 'u8[12288]{0}', space=vmem, size = 0x3000, scoped, tag = 'scoped mem for output reshape']
    %s2 = smov 3
    %v3 = vld [vmem:[%s0] ss:$16 sm:%s2]
    %s4 = scalar_lea.vmem %s0, 30
    %v5 = vld [vmem:[%s4] sm:$0x4]
    %vm6 = vcmask 1042434
    %v7 = vsel %vm6, %v5, %v3
    %vm8 = vcmask 64512
    %9 = vst.msk [vmem:[#allocation0] ss:$8 sm:$0x7] %vm8, %v7
    %s10 = scalar_lea.vmem %s0, 15
    %s11 = smov 3
    %v12 = vld [vmem:[%s10] ss:$16 sm:%s11]
    %13 = vrot.lane.b32.xlu0 %v12, 120
    %v14 = vpop.permute.xlu0 %13
    %vm15 = vcmask 1048512
    %16 = vst.msk [vmem:[#allocation0] ss:$8 sm:$0x3] %vm15, %v14
    %s17 = scalar_lea.vmem %s0, 14
    %s18 = smov 3
    %v19 = vld [vmem:[%s17] ss:$16 sm:%s18]
    %20 = vrot.lane.b32.xlu0 %v19, 112
    %v21 = vpop.permute.xlu0 %20
    %vm22 = vcmask 982912
    %23 = vst.msk [vmem:[#allocation0] ss:$8 sm:$0x3] %vm22, %v21
    %s24 = scalar_lea.vmem %s0, 13
    %s25 = smov 3
    %v26 = vld [vmem:[%s24] ss:$16 sm:%s25]
    %27 = vrot.lane.b32.xlu0 %v26, 104
    %v28 = vpop.permute.xlu0 %27
    %vm29 = vcmask 917312
    %30 = vst.msk [vmem:[#allocation0] ss:$8 sm:$0x3] %vm29, %v28
    %s31 = scalar_lea.vmem %s0, 12
    %s32 = smov 3
    %v33 = vld [vmem:[%s31] ss:$16 sm:%s32]
    %34 = vrot.lane.b32.xlu0 %v33, 96
    %v35 = vpop.permute.xlu0 %34
    %vm36 = vcmask 851712
    %37 = vst.msk [vmem:[#allocation0] ss:$8 sm:$0x3] %vm36, %v35
    %s38 = scalar_lea.vmem %s0, 11
    %s39 = smov 3
    %v40 = vld [vmem:[%s38] ss:$16 sm:%s39]
    %41 = vrot.lane.b32.xlu0 %v40, 88
    %v42 = vpop.permute.xlu0 %41
    %vm43 = vcmask 786112
    %44 = vst.msk [vmem:[#allocation0] ss:$8 sm:$0x3] %vm43, %v42
    %s45 = scalar_lea.vmem %s0, 10
    %s46 = smov 3
    %v47 = vld [vmem:[%s45] ss:$16 sm:%s46]
    %48 = vrot.lane.b32.xlu0 %v47, 80
    %v49 = vpop.permute.xlu0 %48
    %vm50 = vcmask 720512
    %51 = vst.msk [vmem:[#allocation0] ss:$8 sm:$0x3] %vm50, %v49
    %s52 = scalar_lea.vmem %s0, 9
    %s53 = smov 3
    %v54 = vld [vmem:[%s52] ss:$16 sm:%s53]
    %55 = vrot.lane.b32.xlu0 %v54, 72
    %v56 = vpop.permute.xlu0 %55
    %vm57 = vcmask 654912
    %58 = vst.msk [vmem:[#allocation0] ss:$8 sm:$0x3] %vm57, %v56
    %s59 = scalar_lea.vmem %s0, 8
    %s60 = smov 3
    %v61 = vld [vmem:[%s59] ss:$16 sm:%s60]
    %62 = vrot.lane.b32.xlu0 %v61, 64
    %v63 = vpop.permute.xlu0 %62
    %vm64 = vcmask 589312
    %65 = vst.msk [vmem:[#allocation0] ss:$8 sm:$0x3] %vm64, %v63
    %s66 = scalar_lea.vmem %s0, 7
    %s67 = smov 3
    %v68 = vld [vmem:[%s66] ss:$16 sm:%s67]
    %69 = vrot.lane.b32.xlu0 %v68, 56
    %v70 = vpop.permute.xlu0 %69
    %vm71 = vcmask 523712
    %72 = vst.msk [vmem:[#allocation0] ss:$8 sm:$0x3] %vm71, %v70
    %s73 = scalar_lea.vmem %s0, 6
    %s74 = smov 3
    %v75 = vld [vmem:[%s73] ss:$16 sm:%s74]
    %76 = vrot.lane.b32.xlu0 %v75, 48
    %v77 = vpop.permute.xlu0 %76
    %vm78 = vcmask 458112
    %79 = vst.msk [vmem:[#allocation0] ss:$8 sm:$0x3] %vm78, %v77
    %s80 = scalar_lea.vmem %s0, 5
    %s81 = smov 3
    %v82 = vld [vmem:[%s80] ss:$16 sm:%s81]
    %83 = vrot.lane.b32.xlu0 %v82, 40
    %v84 = vpop.permute.xlu0 %83
    %vm85 = vcmask 392512
    %86 = vst.msk [vmem:[#allocation0] ss:$8 sm:$0x3] %vm85, %v84
    %s87 = scalar_lea.vmem %s0, 4
    %s88 = smov 3
    %v89 = vld [vmem:[%s87] ss:$16 sm:%s88]
    %90 = vrot.lane.b32.xlu0 %v89, 32
    %v91 = vpop.permute.xlu0 %90
    %vm92 = vcmask 326912
    %93 = vst.msk [vmem:[#allocation0] ss:$8 sm:$0x3] %vm92, %v91
    %s94 = scalar_lea.vmem %s0, 3
    %s95 = smov 3
    %v96 = vld [vmem:[%s94] ss:$16 sm:%s95]
    %s97 = scalar_lea.vmem %s0, 33
    %v98 = vld [vmem:[%s97] sm:$0x4]
    %vm99 = vcmask 1042434
    %v100 = vsel %vm99, %v98, %v96
    %101 = vrot.lane.b32.xlu0 %v100, 24
    %v102 = vpop.permute.xlu0 %101
    %vm103 = vcmask 261312
    %104 = vst.msk [vmem:[#allocation0] ss:$8 sm:$0x7] %vm103, %v102
    %s105 = scalar_lea.vmem %s0, 2
    %s106 = smov 3
    %v107 = vld [vmem:[%s105] ss:$16 sm:%s106]
    %s108 = scalar_lea.vmem %s0, 32
    %v109 = vld [vmem:[%s108] sm:$0x4]
    %vm110 = vcmask 1042434
    %v111 = vsel %vm110, %v109, %v107
    %112 = vrot.lane.b32.xlu0 %v111, 16
    %v113 = vpop.permute.xlu0 %112
    %vm114 = vcmask 195712
    %115 = vst.msk [vmem:[#allocation0] ss:$8 sm:$0x7] %vm114, %v113
    %s116 = scalar_lea.vmem %s0, 1
    %s117 = smov 3
    %v118 = vld [vmem:[%s116] ss:$16 sm:%s117]
    %s119 = scalar_lea.vmem %s0, 31
    %v120 = vld [vmem:[%s119] sm:$0x4]
    %vm121 = vcmask 1042434
    %v122 = vsel %vm121, %v120, %v118
    %123 = vrot.lane.b32.xlu0 %v122, 8
    %v124 = vpop.permute.xlu0 %123
    %vm125 = vcmask 130112
    %126 = vst.msk [vmem:[#allocation0] ss:$8 sm:$0x7] %vm125, %v124
    %s128 = sshll.u32 1, 1
    %s129 = ssub.s32 %s128, 1
    %v131 = vld [vmem:[#allocation0] sm:%s129]
    %s132 = sshll.u32 1, 1
    %s133 = ssub.s32 %s132, 1
    %134 = vst [vmem:[%s1] sm:%s133] %v131
    %s135 = scalar_lea.vmem [#allocation0], 8
    %v136 = vld [vmem:[%s135] sm:%s129]
    %s137 = sshll.u32 1, 1
    %s138 = ssub.s32 %s137, 1
    %s139 = scalar_lea.vmem %s1, 1
    %140 = vst [vmem:[%s139] sm:%s138] %v136
    %s141 = scalar_lea.vmem [#allocation0], 16
    %v142 = vld [vmem:[%s141] sm:%s129]
    %s143 = sshll.u32 1, 1
    %s144 = ssub.s32 %s143, 1
    %s145 = smul.addr 1, 2
    %s146 = scalar_lea.vmem %s1, %s145
    %147 = vst [vmem:[%s146] sm:%s144] %v142

// kernel: tile.13
$region0: #{tile.13}
  #allocation0 [shape = 's32[1]{0}', space=sflag, size = 0x4, scoped, tag = 'scoped memory for tile.13']
  %s0 = inlined_call_operand.vmem [shape: f32[4], index: 0, kind: input, shape index: {}]
  %s1 = inlined_call_operand.vmem [shape: f32[36,4], index: 1, kind: output, shape index: {}]
  // Predicated region
  $region2: #{tile.13} parent=0 // pred_check
    _
  $region3: #{tile.13} parent=0 // pred_check_branch
    %3 = sbr.rel (0) target = $region5
  $region4: #{tile.13} parent=0 // pred_region
    _
  $region5: #{tile.13} parent=0 // pred_fallthru
    _
  %v4 = vld [vmem:[%s0] ss:$0 sm:$0xff]
  %5 = vst [vmem:[%s1] sm:$0xff] %v4
  %s6 = scalar_lea.vmem %s1, 8
  %7 = vst [vmem:[%s6] sm:$0xff] %v4
  %s8 = scalar_lea.vmem %s1, 16
  %9 = vst [vmem:[%s8] sm:$0xff] %v4
  %s10 = scalar_lea.vmem %s1, 24
  %11 = vst [vmem:[%s10] sm:$0xff] %v4
  %s12 = scalar_lea.vmem %s1, 32
  %13 = vst [vmem:[%s12] sm:$0xff] %v4

// kernel: tile.14
$region0: #{tile.14}
  %s0 = inlined_call_operand.vmem [shape: f32[36,4], index: 0, kind: input, shape index: {}]
  %s1 = inlined_call_operand.vmem [shape: f32[1,144], index: 1, kind: output, shape index: {}]
  $region1: #{tile.14} parent=0
    #allocation0 [shape = 'u8[8192]{0}', space=vmem, size = 0x2000, scoped, tag = 'scoped mem for output reshape']
    %v2 = vld [vmem:[%s0] sm:$0x1]
    %s3 = scalar_lea.vmem %s0, 31
    %v4 = vld [vmem:[%s3] sm:$0x2]
    %vm5 = vcmask 1041409
    %v6 = vsel %vm5, %v4, %v2
    %vm7 = vcmask 31744
    %8 = vst.msk [vmem:[#allocation0] ss:$8 sm:$0x3] %vm7, %v6
    %s9 = scalar_lea.vmem %s0, 31
    %v10 = vld [vmem:[%s9] sm:$0x1]
    %11 = vrot.lane.b32.xlu0 %v10, 124
    %v12 = vpop.permute.xlu0 %11
    %vm13 = vcmask 1048544
    %14 = vst.msk [vmem:[#allocation0] sm:$0x1] %vm13, %v12
    %s15 = scalar_lea.vmem %s0, 30
    %v16 = vld [vmem:[%s15] sm:$0x1]
    %17 = vrot.lane.b32.xlu0 %v16, 120
    %v18 = vpop.permute.xlu0 %17
    %vm19 = vcmask 1015744
    %20 = vst.msk [vmem:[#allocation0] sm:$0x1] %vm19, %v18
    %s21 = scalar_lea.vmem %s0, 29
    %v22 = vld [vmem:[%s21] sm:$0x1]
    %23 = vrot.lane.b32.xlu0 %v22, 116
    %v24 = vpop.permute.xlu0 %23
    %vm25 = vcmask 982944
    %26 = vst.msk [vmem:[#allocation0] sm:$0x1] %vm25, %v24
    %s27 = scalar_lea.vmem %s0, 28
    %v28 = vld [vmem:[%s27] sm:$0x1]
    %29 = vrot.lane.b32.xlu0 %v28, 112
    %v30 = vpop.permute.xlu0 %29
    %vm31 = vcmask 950144
    %32 = vst.msk [vmem:[#allocation0] sm:$0x1] %vm31, %v30
    %s33 = scalar_lea.vmem %s0, 27
    %v34 = vld [vmem:[%s33] sm:$0x1]
    %35 = vrot.lane.b32.xlu0 %v34, 108
    %v36 = vpop.permute.xlu0 %35
    %vm37 = vcmask 917344
    %38 = vst.msk [vmem:[#allocation0] sm:$0x1] %vm37, %v36
    %s39 = scalar_lea.vmem %s0, 26
    %v40 = vld [vmem:[%s39] sm:$0x1]
    %41 = vrot.lane.b32.xlu0 %v40, 104
    %v42 = vpop.permute.xlu0 %41
    %vm43 = vcmask 884544
    %44 = vst.msk [vmem:[#allocation0] sm:$0x1] %vm43, %v42
    %s45 = scalar_lea.vmem %s0, 25
    %v46 = vld [vmem:[%s45] sm:$0x1]
    %47 = vrot.lane.b32.xlu0 %v46, 100
    %v48 = vpop.permute.xlu0 %47
    %vm49 = vcmask 851744
    %50 = vst.msk [vmem:[#allocation0] sm:$0x1] %vm49, %v48
    %s51 = scalar_lea.vmem %s0, 24
    %v52 = vld [vmem:[%s51] sm:$0x1]
    %53 = vrot.lane.b32.xlu0 %v52, 96
    %v54 = vpop.permute.xlu0 %53
    %vm55 = vcmask 818944
    %56 = vst.msk [vmem:[#allocation0] sm:$0x1] %vm55, %v54
    %s57 = scalar_lea.vmem %s0, 23
    %v58 = vld [vmem:[%s57] sm:$0x1]
    %59 = vrot.lane.b32.xlu0 %v58, 92
    %v60 = vpop.permute.xlu0 %59
    %vm61 = vcmask 786144
    %62 = vst.msk [vmem:[#allocation0] sm:$0x1] %vm61, %v60
    %s63 = scalar_lea.vmem %s0, 22
    %v64 = vld [vmem:[%s63] sm:$0x1]
    %65 = vrot.lane.b32.xlu0 %v64, 88
    %v66 = vpop.permute.xlu0 %65
    %vm67 = vcmask 753344
    %68 = vst.msk [vmem:[#allocation0] sm:$0x1] %vm67, %v66
    %s69 = scalar_lea.vmem %s0, 21
    %v70 = vld [vmem:[%s69] sm:$0x1]
    %71 = vrot.lane.b32.xlu0 %v70, 84
    %v72 = vpop.permute.xlu0 %71
    %vm73 = vcmask 720544
    %74 = vst.msk [vmem:[#allocation0] sm:$0x1] %vm73, %v72
    %s75 = scalar_lea.vmem %s0, 20
    %v76 = vld [vmem:[%s75] sm:$0x1]
    %77 = vrot.lane.b32.xlu0 %v76, 80
    %v78 = vpop.permute.xlu0 %77
    %vm79 = vcmask 687744
    %80 = vst.msk [vmem:[#allocation0] sm:$0x1] %vm79, %v78
    %s81 = scalar_lea.vmem %s0, 19
    %v82 = vld [vmem:[%s81] sm:$0x1]
    %83 = vrot.lane.b32.xlu0 %v82, 76
    %v84 = vpop.permute.xlu0 %83
    %vm85 = vcmask 654944
    %86 = vst.msk [vmem:[#allocation0] sm:$0x1] %vm85, %v84
    %s87 = scalar_lea.vmem %s0, 18
    %v88 = vld [vmem:[%s87] sm:$0x1]
    %89 = vrot.lane.b32.xlu0 %v88, 72
    %v90 = vpop.permute.xlu0 %89
    %vm91 = vcmask 622144
    %92 = vst.msk [vmem:[#allocation0] sm:$0x1] %vm91, %v90
    %s93 = scalar_lea.vmem %s0, 17
    %v94 = vld [vmem:[%s93] sm:$0x1]
    %95 = vrot.lane.b32.xlu0 %v94, 68
    %v96 = vpop.permute.xlu0 %95
    %vm97 = vcmask 589344
    %98 = vst.msk [vmem:[#allocation0] sm:$0x1] %vm97, %v96
    %s99 = scalar_lea.vmem %s0, 16
    %v100 = vld [vmem:[%s99] sm:$0x1]
    %101 = vrot.lane.b32.xlu0 %v100, 64
    %v102 = vpop.permute.xlu0 %101
    %vm103 = vcmask 556544
    %104 = vst.msk [vmem:[#allocation0] sm:$0x1] %vm103, %v102
    %s105 = scalar_lea.vmem %s0, 15
    %v106 = vld [vmem:[%s105] sm:$0x1]
    %107 = vrot.lane.b32.xlu0 %v106, 60
    %v108 = vpop.permute.xlu0 %107
    %vm109 = vcmask 523744
    %110 = vst.msk [vmem:[#allocation0] sm:$0x1] %vm109, %v108
    %s111 = scalar_lea.vmem %s0, 14
    %v112 = vld [vmem:[%s111] sm:$0x1]
    %113 = vrot.lane.b32.xlu0 %v112, 56
    %v114 = vpop.permute.xlu0 %113
    %vm115 = vcmask 490944
    %116 = vst.msk [vmem:[#allocation0] sm:$0x1] %vm115, %v114
    %s117 = scalar_lea.vmem %s0, 13
    %v118 = vld [vmem:[%s117] sm:$0x1]
    %119 = vrot.lane.b32.xlu0 %v118, 52
    %v120 = vpop.permute.xlu0 %119
    %vm121 = vcmask 458144
    %122 = vst.msk [vmem:[#allocation0] sm:$0x1] %vm121, %v120
    %s123 = scalar_lea.vmem %s0, 12
    %v124 = vld [vmem:[%s123] sm:$0x1]
    %125 = vrot.lane.b32.xlu0 %v124, 48
    %v126 = vpop.permute.xlu0 %125
    %vm127 = vcmask 425344
    %128 = vst.msk [vmem:[#allocation0] sm:$0x1] %vm127, %v126
    %s129 = scalar_lea.vmem %s0, 11
    %v130 = vld [vmem:[%s129] sm:$0x1]
    %131 = vrot.lane.b32.xlu0 %v130, 44
    %v132 = vpop.permute.xlu0 %131
    %vm133 = vcmask 392544
    %134 = vst.msk [vmem:[#allocation0] sm:$0x1] %vm133, %v132
    %s135 = scalar_lea.vmem %s0, 10
    %v136 = vld [vmem:[%s135] sm:$0x1]
    %137 = vrot.lane.b32.xlu0 %v136, 40
    %v138 = vpop.permute.xlu0 %137
    %vm139 = vcmask 359744
    %140 = vst.msk [vmem:[#allocation0] sm:$0x1] %vm139, %v138
    %s141 = scalar_lea.vmem %s0, 9
    %v142 = vld [vmem:[%s141] sm:$0x1]
    %143 = vrot.lane.b32.xlu0 %v142, 36
    %v144 = vpop.permute.xlu0 %143
    %vm145 = vcmask 326944
    %146 = vst.msk [vmem:[#allocation0] sm:$0x1] %vm145, %v144
    %s147 = scalar_lea.vmem %s0, 8
    %v148 = vld [vmem:[%s147] sm:$0x1]
    %149 = vrot.lane.b32.xlu0 %v148, 32
    %v150 = vpop.permute.xlu0 %149
    %vm151 = vcmask 294144
    %152 = vst.msk [vmem:[#allocation0] sm:$0x1] %vm151, %v150
    %s153 = scalar_lea.vmem %s0, 7
    %v154 = vld [vmem:[%s153] sm:$0x1]
    %155 = vrot.lane.b32.xlu0 %v154, 28
    %v156 = vpop.permute.xlu0 %155
    %vm157 = vcmask 261344
    %158 = vst.msk [vmem:[#allocation0] sm:$0x1] %vm157, %v156
    %s159 = scalar_lea.vmem %s0, 6
    %v160 = vld [vmem:[%s159] sm:$0x1]
    %161 = vrot.lane.b32.xlu0 %v160, 24
    %v162 = vpop.permute.xlu0 %161
    %vm163 = vcmask 228544
    %164 = vst.msk [vmem:[#allocation0] sm:$0x1] %vm163, %v162
    %s165 = scalar_lea.vmem %s0, 5
    %v166 = vld [vmem:[%s165] sm:$0x1]
    %167 = vrot.lane.b32.xlu0 %v166, 20
    %v168 = vpop.permute.xlu0 %167
    %vm169 = vcmask 195744
    %170 = vst.msk [vmem:[#allocation0] sm:$0x1] %vm169, %v168
    %s171 = scalar_lea.vmem %s0, 4
    %v172 = vld [vmem:[%s171] sm:$0x1]
    %173 = vrot.lane.b32.xlu0 %v172, 16
    %v174 = vpop.permute.xlu0 %173
    %vm175 = vcmask 162944
    %176 = vst.msk [vmem:[#allocation0] sm:$0x1] %vm175, %v174
    %s177 = scalar_lea.vmem %s0, 3
    %v178 = vld [vmem:[%s177] sm:$0x1]
    %s179 = scalar_lea.vmem %s0, 34
    %v180 = vld [vmem:[%s179] sm:$0x2]
    %vm181 = vcmask 1041409
    %v182 = vsel %vm181, %v180, %v178
    %183 = vrot.lane.b32.xlu0 %v182, 12
    %v184 = vpop.permute.xlu0 %183
    %vm185 = vcmask 130144
    %186 = vst.msk [vmem:[#allocation0] ss:$8 sm:$0x3] %vm185, %v184
    %s187 = scalar_lea.vmem %s0, 2
    %v188 = vld [vmem:[%s187] sm:$0x1]
    %s189 = scalar_lea.vmem %s0, 33
    %v190 = vld [vmem:[%s189] sm:$0x2]
    %vm191 = vcmask 1041409
    %v192 = vsel %vm191, %v190, %v188
    %193 = vrot.lane.b32.xlu0 %v192, 8
    %v194 = vpop.permute.xlu0 %193
    %vm195 = vcmask 97344
    %196 = vst.msk [vmem:[#allocation0] ss:$8 sm:$0x3] %vm195, %v194
    %s197 = scalar_lea.vmem %s0, 1
    %v198 = vld [vmem:[%s197] sm:$0x1]
    %s199 = scalar_lea.vmem %s0, 32
    %v200 = vld [vmem:[%s199] sm:$0x2]
    %vm201 = vcmask 1041409
    %v202 = vsel %vm201, %v200, %v198
    %203 = vrot.lane.b32.xlu0 %v202, 4
    %v204 = vpop.permute.xlu0 %203
    %vm205 = vcmask 64544
    %206 = vst.msk [vmem:[#allocation0] ss:$8 sm:$0x3] %vm205, %v204
    %s208 = sshll.u32 1, 1
    %s209 = ssub.s32 %s208, 1
    %v211 = vld [vmem:[#allocation0] sm:%s209]
    %s212 = sshll.u32 1, 1
    %s213 = ssub.s32 %s212, 1
    %214 = vst [vmem:[%s1] sm:%s213] %v211
    %s215 = scalar_lea.vmem [#allocation0], 8
    %v216 = vld [vmem:[%s215] sm:%s209]
    %s217 = sshll.u32 1, 1
    %s218 = ssub.s32 %s217, 1
    %s219 = scalar_lea.vmem %s1, 1
    %220 = vst [vmem:[%s219] sm:%s218] %v216

// kernel: classic_net_forward.1
$region0: #{classic_net_forward.1}
  #allocation0 [shape = 'u32[]', space=smem, size = 0x4, offset = 0x4, fixed_abs, tag = 'smem constant byte address 0x4 - core index']
  #allocation1 [shape = 'u32[144,128]{1,0:T(1,128)}', space=vmem, size = 0x12000, scoped, tag = 'internal scratch']
  %s0 = inlined_call_operand.vmem [shape: f32[2,144], index: 0, kind: input, shape index: {}]
  %s1 = inlined_call_operand.vmem [shape: f32[144,144], index: 1, kind: input, shape index: {}]
  %s2 = inlined_call_operand.vmem [shape: f32[1,144], index: 2, kind: input, shape index: {}]
  %s3 = inlined_call_operand.vmem [shape: f32[144,288], index: 3, kind: input, shape index: {}]
  %s4 = inlined_call_operand.vmem [shape: f32[1,288], index: 4, kind: input, shape index: {}]
  %s5 = inlined_call_operand.vmem [shape: f32[9,8,36], index: 5, kind: input, shape index: {}]
  %s6 = inlined_call_operand.vmem [shape: f32[1,36], index: 6, kind: input, shape index: {}]
  %s7 = inlined_call_operand.vmem [shape: f32[36,128], index: 7, kind: input, shape index: {}]
  %s8 = inlined_call_operand.vmem [shape: f32[1,128], index: 8, kind: input, shape index: {}]
  %s9 = inlined_call_operand.hbm [shape: f32[2,128], index: 9, kind: output, shape index: {}]
  %s10 = sld [smem:[#allocation0]]
  $region46: #{classic_net_forward.1} parent=0
    _
  %s12 = ssub.s32 1, %s10
  %s13 = scalar_select 0, %s12, %s10
  $region1: #{classic_net_forward.1} parent=0
    #allocation2 [shape = 'u8[1024]{0}', space=vmem, size = 0x400, scoped, tag = 'output window, operand 0, single buffered']
    #allocation3 [shape = 's32[1]{0}', space=sflag, size = 0x4, scoped, tag = 'scoped memory for classic_net_forward.1']
    %14 = vsyncpa [#allocation3], 0
    // Predicated region
    $region2: #{classic_net_forward.1} parent=1 // pred_check
      _
    $region3: #{classic_net_forward.1} parent=1 // pred_check_branch
      %16 = sbr.rel (0) target = $region5
    $region4: #{classic_net_forward.1} parent=1 // pred_region
      _
    $region5: #{classic_net_forward.1} parent=1 // pred_fallthru
      _
    // Predicated region
    $region6: #{classic_net_forward.1} parent=1 // pred_check
      _
    $region7: #{classic_net_forward.1} parent=1 // pred_check_branch
      %18 = sbr.rel (0) target = $region9
    $region8: #{classic_net_forward.1} parent=1 // pred_region
      _
    $region9: #{classic_net_forward.1} parent=1 // pred_fallthru
      _
    // Predicated region
    $region10: #{classic_net_forward.1} parent=1 // pred_check
      _
    $region11: #{classic_net_forward.1} parent=1 // pred_check_branch
      %20 = sbr.rel (0) target = $region13
    $region12: #{classic_net_forward.1} parent=1 // pred_region
      _
    $region13: #{classic_net_forward.1} parent=1 // pred_fallthru
      _
    // Predicated region
    $region14: #{classic_net_forward.1} parent=1 // pred_check
      _
    $region15: #{classic_net_forward.1} parent=1 // pred_check_branch
      %22 = sbr.rel (0) target = $region17
    $region16: #{classic_net_forward.1} parent=1 // pred_region
      _
    $region17: #{classic_net_forward.1} parent=1 // pred_fallthru
      _
    // Predicated region
    $region18: #{classic_net_forward.1} parent=1 // pred_check
      _
    $region19: #{classic_net_forward.1} parent=1 // pred_check_branch
      %24 = sbr.rel (0) target = $region21
    $region20: #{classic_net_forward.1} parent=1 // pred_region
      _
    $region21: #{classic_net_forward.1} parent=1 // pred_fallthru
      _
    // Predicated region
    $region22: #{classic_net_forward.1} parent=1 // pred_check
      _
    $region23: #{classic_net_forward.1} parent=1 // pred_check_branch
      %26 = sbr.rel (0) target = $region25
    $region24: #{classic_net_forward.1} parent=1 // pred_region
      _
    $region25: #{classic_net_forward.1} parent=1 // pred_fallthru
      _
    // Predicated region
    $region26: #{classic_net_forward.1} parent=1 // pred_check
      _
    $region27: #{classic_net_forward.1} parent=1 // pred_check_branch
      %28 = sbr.rel (0) target = $region29
    $region28: #{classic_net_forward.1} parent=1 // pred_region
      _
    $region29: #{classic_net_forward.1} parent=1 // pred_fallthru
      _
    // Predicated region
    $region30: #{classic_net_forward.1} parent=1 // pred_check
      _
    $region31: #{classic_net_forward.1} parent=1 // pred_check_branch
      %30 = sbr.rel (0) target = $region33
    $region32: #{classic_net_forward.1} parent=1 // pred_region
      _
    $region33: #{classic_net_forward.1} parent=1 // pred_fallthru
      _
    // Predicated region
    $region34: #{classic_net_forward.1} parent=1 // pred_check
      _
    $region35: #{classic_net_forward.1} parent=1 // pred_check_branch
      %32 = sbr.rel (0) target = $region37
    $region36: #{classic_net_forward.1} parent=1 // pred_region
      _
    $region37: #{classic_net_forward.1} parent=1 // pred_fallthru
      _
    %v33 = vld [vmem:[%s0] sm:$0xf]
    %v34 = vld [vmem:[%s1] sm:$0xff]
    %v35 = vld [vmem:[%s1 + $0x8] sm:$0xff]
    %v36 = vld [vmem:[%s1 + $0x10] sm:$0xff]
    %v37 = vld [vmem:[%s1 + $0x18] sm:$0xff]
    %v38 = vld [vmem:[%s1 + $0x20] sm:$0xff]
    %v39 = vld [vmem:[%s1 + $0x28] sm:$0xff]
    %v40 = vld [vmem:[%s1 + $0x30] sm:$0xff]
    %v41 = vld [vmem:[%s1 + $0x38] sm:$0xff]
    %v42 = vld [vmem:[%s1 + $0x40] sm:$0xff]
    %v43 = vld [vmem:[%s1 + $0x48] sm:$0xff]
    %v44 = vld [vmem:[%s1 + $0x50] sm:$0xff]
    %v45 = vld [vmem:[%s1 + $0x58] sm:$0xff]
    %v46 = vld [vmem:[%s1 + $0x60] sm:$0xff]
    %v47 = vld [vmem:[%s1 + $0x68] sm:$0xff]
    %v48 = vld [vmem:[%s1 + $0x70] sm:$0xff]
    %v49 = vld [vmem:[%s1 + $0x78] sm:$0xff]
    %v50 = vld [vmem:[%s1 + $0x80] sm:$0xff]
    %v51 = vld [vmem:[%s1 + $0x88] sm:$0xff]
    %v52 = vld [vmem:[%s1 + $0x90] sm:$0xff]
    %v53 = vld [vmem:[%s1 + $0x98] sm:$0xff]
    %v54 = vld [vmem:[%s1 + $0xa0] sm:$0xff]
    %v55 = vld [vmem:[%s1 + $0xa8] sm:$0xff]
    %v56 = vld [vmem:[%s1 + $0xb0] sm:$0xff]
    %v57 = vld [vmem:[%s1 + $0xb8] sm:$0xff]
    %v58 = vld [vmem:[%s1 + $0xc0] sm:$0xff]
    %v59 = vld [vmem:[%s1 + $0xc8] sm:$0xff]
    %v60 = vld [vmem:[%s1 + $0xd0] sm:$0xff]
    %v61 = vld [vmem:[%s1 + $0xd8] sm:$0xff]
    %v62 = vld [vmem:[%s1 + $0xe0] sm:$0xff]
    %v63 = vld [vmem:[%s1 + $0xe8] sm:$0xff]
    %v64 = vld [vmem:[%s1 + $0xf0] sm:$0xff]
    %v65 = vld [vmem:[%s1 + $0xf8] sm:$0xff]
    %v66 = vld [vmem:[%s1 + $0x100] sm:$0xff]
    %v67 = vld [vmem:[%s1 + $0x108] sm:$0xff]
    %v68 = vld [vmem:[%s1 + $0x110] sm:$0xff]
    %v69 = vld [vmem:[%s1 + $0x118] sm:$0xff]
    %v70 = vld [vmem:[%s2] sm:$0x3]
    %v72 = vlaneseq
    %v73 = vshrl.u32 %v72, 7
    %v74 = vsub.s32 0, %v73
    %v75 = vrot.slane %v70, %v74
    %v76 = vlaneseq
    %v77 = vshrl.u32 %v76, 7
    %v78 = vsub.s32 1, %v77
    %v79 = vrot.slane %v70, %v78
    %v84 = vunpack.c.l.s4 1983009808
    %v85 = vunpack.c.0.s8 %v84
    %v86 = vlaneseq
    %v87 = vshrl.u32 %v86, 7
    %v88 = vsub.s32 %v85, %v87
    %v89 = vrot.slane %v33, %v88
    %v90 = vcombine.high %v89, %v89
    %vm92 = vcmask 130048
    %v93 = vsel %vm92, %v90, 0
    %95 = vmatprep.subr.mxu0 %v65
    %96 = vmatpush1.msra.mxu0 %v64
    %97 = vmatprep.subr.mxu0 %v63
    %98 = vmatpush1.msra.mxu0 %v62
    %99 = vmatprep.subr.mxu0 %v61
    %100 = vmatpush1.msra.mxu0 %v60
    %101 = vmatprep.subr.mxu0 %v59
    %102 = vmatpush1.msra.mxu0 %v58
    %103 = vmatprep.subr.mxu0 %v57
    %104 = vmatpush1.msra.mxu0 %v56
    %105 = vmatprep.subr.mxu0 %v55
    %106 = vmatpush1.msra.mxu0 %v54
    %107 = vmatprep.subr.mxu0 %v53
    %108 = vmatpush1.msra.mxu0 %v52
    %109 = vmatprep.subr.mxu0 %v51
    %110 = vmatpush1.msra.mxu0 %v50
    %111 = vmatprep.subr.mxu0 %v49
    %112 = vmatpush1.msra.mxu0 %v48
    %113 = vmatprep.subr.mxu0 %v47
    %114 = vmatpush1.msra.mxu0 %v46
    %115 = vmatprep.subr.mxu0 %v45
    %116 = vmatpush1.msra.mxu0 %v44
    %117 = vmatprep.subr.mxu0 %v43
    %118 = vmatpush1.msra.mxu0 %v42
    %119 = vmatprep.subr.mxu0 %v41
    %120 = vmatpush1.msra.mxu0 %v40
    %121 = vmatprep.subr.mxu0 %v39
    %122 = vmatpush1.msra.mxu0 %v38
    %123 = vmatprep.subr.mxu0 %v37
    %124 = vmatpush1.msra.mxu0 %v36
    %125 = vmatprep.subr.mxu0 %v35
    %126 = vmatpush1.msra.mxu0 %v34
    %127 = vmatprep.subr.mxu0 0.0
    %128 = vmatpush2.msra.mxu0 0.0
    %129 = vmatprep.subr.mxu0 0.0
    %130 = vmatpush2.msra.mxu0 0.0
    %131 = vmatprep.subr.mxu0 0.0
    %132 = vmatpush2.msra.mxu0 0.0
    %133 = vmatprep.subr.mxu0 0.0
    %134 = vmatpush2.msra.mxu0 0.0
    %135 = vmatprep.subr.mxu0 0.0
    %136 = vmatpush2.msra.mxu0 0.0
    %137 = vmatprep.subr.mxu0 0.0
    %138 = vmatpush2.msra.mxu0 0.0
    %139 = vmatprep.subr.mxu0 0.0
    %140 = vmatpush2.msra.mxu0 0.0
    %141 = vmatprep.subr.mxu0 0.0
    %142 = vmatpush2.msra.mxu0 0.0
    %143 = vmatprep.subr.mxu0 0.0
    %144 = vmatpush2.msra.mxu0 0.0
    %145 = vmatprep.subr.mxu0 0.0
    %146 = vmatpush2.msra.mxu0 0.0
    %147 = vmatprep.subr.mxu0 0.0
    %148 = vmatpush2.msra.mxu0 0.0
    %149 = vmatprep.subr.mxu0 0.0
    %150 = vmatpush2.msra.mxu0 0.0
    %151 = vmatprep.subr.mxu0 0.0
    %152 = vmatpush2.msra.mxu0 0.0
    %153 = vmatprep.subr.mxu0 0.0
    %154 = vmatpush2.msra.mxu0 0.0
    %155 = vmatprep.subr.mxu0 %v69
    %156 = vmatpush2.msra.mxu0 %v68
    %157 = vmatprep.subr.mxu0 %v67
    %158 = vmatpush2.msra.mxu0 %v66
    %159 = vmatprep.mubr.f32.mxu0 %v93
    %160 = vmatmul.mubr.f32.gmra.mxu0 %v89
    %v161 = vpop.f32.mrf.mxu0
    %v162 = vadd.f32 %v75, %v161
    %v163 = vpop.f32.mrf.mxu0
    %v164 = vadd.f32 %v79, %v163
    %165 = vdwg.mxu0
    %v166 = vmax.f32 %v162, 0.0
    %v167 = vmax.f32 %v164, 0.0
    %v168 = vld [vmem:[%s3] sm:$0xff]
    %v169 = vld [vmem:[%s3 + $0x8] sm:$0xff]
    %v170 = vld [vmem:[%s3 + $0x10] sm:$0xff]
    %v171 = vld [vmem:[%s3 + $0x18] sm:$0xff]
    %v172 = vld [vmem:[%s3 + $0x20] sm:$0xff]
    %v173 = vld [vmem:[%s3 + $0x28] sm:$0xff]
    %v174 = vld [vmem:[%s3 + $0x30] sm:$0xff]
    %v175 = vld [vmem:[%s3 + $0x38] sm:$0xff]
    %v176 = vld [vmem:[%s3 + $0x40] sm:$0xff]
    %v177 = vld [vmem:[%s3 + $0x48] sm:$0xff]
    %v178 = vld [vmem:[%s3 + $0x50] sm:$0xff]
    %v179 = vld [vmem:[%s3 + $0x58] sm:$0xff]
    %v180 = vld [vmem:[%s3 + $0x60] sm:$0xff]
    %v181 = vld [vmem:[%s3 + $0x68] sm:$0xff]
    %v182 = vld [vmem:[%s3 + $0x70] sm:$0xff]
    %v183 = vld [vmem:[%s3 + $0x78] sm:$0xff]
    %v184 = vld [vmem:[%s3 + $0x80] sm:$0xff]
    %v185 = vld [vmem:[%s3 + $0x88] sm:$0xff]
    %v186 = vld [vmem:[%s3 + $0x90] sm:$0xff]
    %v187 = vld [vmem:[%s3 + $0x98] sm:$0xff]
    %v188 = vld [vmem:[%s3 + $0xa0] sm:$0xff]
    %v189 = vld [vmem:[%s3 + $0xa8] sm:$0xff]
    %v190 = vld [vmem:[%s3 + $0xb0] sm:$0xff]
    %v191 = vld [vmem:[%s3 + $0xb8] sm:$0xff]
    %v192 = vld [vmem:[%s3 + $0xc0] sm:$0xff]
    %v193 = vld [vmem:[%s3 + $0xc8] sm:$0xff]
    %v194 = vld [vmem:[%s3 + $0xd0] sm:$0xff]
    %v195 = vld [vmem:[%s3 + $0xd8] sm:$0xff]
    %v196 = vld [vmem:[%s3 + $0xe0] sm:$0xff]
    %v197 = vld [vmem:[%s3 + $0xe8] sm:$0xff]
    %v198 = vld [vmem:[%s3 + $0xf0] sm:$0xff]
    %v199 = vld [vmem:[%s3 + $0xf8] sm:$0xff]
    %v200 = vld [vmem:[%s3 + $0x100] sm:$0xff]
    %v201 = vld [vmem:[%s3 + $0x108] sm:$0xff]
    %v202 = vld [vmem:[%s3 + $0x110] sm:$0xff]
    %v203 = vld [vmem:[%s3 + $0x118] sm:$0xff]
    %v204 = vld [vmem:[%s3 + $0x120] sm:$0xff]
    %v205 = vld [vmem:[%s3 + $0x128] sm:$0xff]
    %v206 = vld [vmem:[%s3 + $0x130] sm:$0xff]
    %v207 = vld [vmem:[%s3 + $0x138] sm:$0xff]
    %v208 = vld [vmem:[%s3 + $0x140] sm:$0xff]
    %v209 = vld [vmem:[%s3 + $0x148] sm:$0xff]
    %v210 = vld [vmem:[%s3 + $0x150] sm:$0xff]
    %v211 = vld [vmem:[%s3 + $0x158] sm:$0xff]
    %v212 = vld [vmem:[%s3 + $0x160] sm:$0xff]
    %v213 = vld [vmem:[%s3 + $0x168] sm:$0xff]
    %v214 = vld [vmem:[%s3 + $0x170] sm:$0xff]
    %v215 = vld [vmem:[%s3 + $0x178] sm:$0xff]
    %v216 = vld [vmem:[%s3 + $0x180] sm:$0xff]
    %v217 = vld [vmem:[%s3 + $0x188] sm:$0xff]
    %v218 = vld [vmem:[%s3 + $0x190] sm:$0xff]
    %v219 = vld [vmem:[%s3 + $0x198] sm:$0xff]
    %v220 = vld [vmem:[%s3 + $0x1a0] sm:$0xff]
    %v221 = vld [vmem:[%s3 + $0x1a8] sm:$0xff]
    %v222 = vld [vmem:[%s4] sm:$0x7]
    %v224 = vlaneseq
    %v225 = vshrl.u32 %v224, 7
    %v226 = vsub.s32 0, %v225
    %v227 = vrot.slane %v222, %v226
    %v228 = vlaneseq
    %v229 = vshrl.u32 %v228, 7
    %v230 = vsub.s32 1, %v229
    %v231 = vrot.slane %v222, %v230
    %v232 = vlaneseq
    %v233 = vshrl.u32 %v232, 7
    %v234 = vsub.s32 2, %v233
    %v235 = vrot.slane %v222, %v234
    %v240 = vsel %vm92, %v167, 0
    %242 = vmatprep.subr.mxu0 %v214
    %243 = vmatpush1.msra.mxu0 %v213
    %244 = vmatprep.subr.mxu0 %v211
    %245 = vmatpush1.msra.mxu0 %v210
    %246 = vmatprep.subr.mxu0 %v208
    %247 = vmatpush1.msra.mxu0 %v207
    %248 = vmatprep.subr.mxu0 %v205
    %249 = vmatpush1.msra.mxu0 %v204
    %250 = vmatprep.subr.mxu0 %v202
    %251 = vmatpush1.msra.mxu0 %v201
    %252 = vmatprep.subr.mxu0 %v199
    %253 = vmatpush1.msra.mxu0 %v198
    %254 = vmatprep.subr.mxu0 %v196
    %255 = vmatpush1.msra.mxu0 %v195
    %256 = vmatprep.subr.mxu0 %v193
    %257 = vmatpush1.msra.mxu0 %v192
    %258 = vmatprep.subr.mxu0 %v190
    %259 = vmatpush1.msra.mxu0 %v189
    %260 = vmatprep.subr.mxu0 %v187
    %261 = vmatpush1.msra.mxu0 %v186
    %262 = vmatprep.subr.mxu0 %v184
    %263 = vmatpush1.msra.mxu0 %v183
    %264 = vmatprep.subr.mxu0 %v181
    %265 = vmatpush1.msra.mxu0 %v180
    %266 = vmatprep.subr.mxu0 %v178
    %267 = vmatpush1.msra.mxu0 %v177
    %268 = vmatprep.subr.mxu0 %v175
    %269 = vmatpush1.msra.mxu0 %v174
    %270 = vmatprep.subr.mxu0 %v172
    %271 = vmatpush1.msra.mxu0 %v171
    %272 = vmatprep.subr.mxu0 %v169
    %273 = vmatpush1.msra.mxu0 %v168
    %274 = vmatprep.subr.mxu0 0.0
    %275 = vmatpush2.msra.mxu0 0.0
    %276 = vmatprep.subr.mxu0 0.0
    %277 = vmatpush2.msra.mxu0 0.0
    %278 = vmatprep.subr.mxu0 0.0
    %279 = vmatpush2.msra.mxu0 0.0
    %280 = vmatprep.subr.mxu0 0.0
    %281 = vmatpush2.msra.mxu0 0.0
    %282 = vmatprep.subr.mxu0 0.0
    %283 = vmatpush2.msra.mxu0 0.0
    %284 = vmatprep.subr.mxu0 0.0
    %285 = vmatpush2.msra.mxu0 0.0
    %286 = vmatprep.subr.mxu0 0.0
    %287 = vmatpush2.msra.mxu0 0.0
    %288 = vmatprep.subr.mxu0 0.0
    %289 = vmatpush2.msra.mxu0 0.0
    %290 = vmatprep.subr.mxu0 0.0
    %291 = vmatpush2.msra.mxu0 0.0
    %292 = vmatprep.subr.mxu0 0.0
    %293 = vmatpush2.msra.mxu0 0.0
    %294 = vmatprep.subr.mxu0 0.0
    %295 = vmatpush2.msra.mxu0 0.0
    %296 = vmatprep.subr.mxu0 0.0
    %297 = vmatpush2.msra.mxu0 0.0
    %298 = vmatprep.subr.mxu0 0.0
    %299 = vmatpush2.msra.mxu0 0.0
    %300 = vmatprep.subr.mxu0 0.0
    %301 = vmatpush2.msra.mxu0 0.0
    %302 = vmatprep.subr.mxu0 %v220
    %303 = vmatpush2.msra.mxu0 %v219
    %304 = vmatprep.subr.mxu0 %v217
    %305 = vmatpush2.msra.mxu0 %v216
    %306 = vmatprep.mubr.f32.mxu0 %v240
    %307 = vmatmul.mubr.f32.gmra.mxu0 %v166
    %v308 = vpop.f32.mrf.mxu0
    %v309 = vadd.f32 %v227, %v308
    %v310 = vpop.f32.mrf.mxu0
    %v311 = vadd.f32 %v231, %v310
    %312 = vdwg.mxu0
    %313 = vmatprep.subr.mxu0 0.0
    %314 = vmatpush1.msra.mxu0 %v215
    %315 = vmatprep.subr.mxu0 0.0
    %316 = vmatpush1.msra.mxu0 %v212
    %317 = vmatprep.subr.mxu0 0.0
    %318 = vmatpush1.msra.mxu0 %v209
    %319 = vmatprep.subr.mxu0 0.0
    %320 = vmatpush1.msra.mxu0 %v206
    %321 = vmatprep.subr.mxu0 0.0
    %322 = vmatpush1.msra.mxu0 %v203
    %323 = vmatprep.subr.mxu0 0.0
    %324 = vmatpush1.msra.mxu0 %v200
    %325 = vmatprep.subr.mxu0 0.0
    %326 = vmatpush1.msra.mxu0 %v197
    %327 = vmatprep.subr.mxu0 0.0
    %328 = vmatpush1.msra.mxu0 %v194
    %329 = vmatprep.subr.mxu0 0.0
    %330 = vmatpush1.msra.mxu0 %v191
    %331 = vmatprep.subr.mxu0 0.0
    %332 = vmatpush1.msra.mxu0 %v188
    %333 = vmatprep.subr.mxu0 0.0
    %334 = vmatpush1.msra.mxu0 %v185
    %335 = vmatprep.subr.mxu0 0.0
    %336 = vmatpush1.msra.mxu0 %v182
    %337 = vmatprep.subr.mxu0 0.0
    %338 = vmatpush1.msra.mxu0 %v179
    %339 = vmatprep.subr.mxu0 0.0
    %340 = vmatpush1.msra.mxu0 %v176
    %341 = vmatprep.subr.mxu0 0.0
    %342 = vmatpush1.msra.mxu0 %v173
    %343 = vmatprep.subr.mxu0 0.0
    %344 = vmatpush1.msra.mxu0 %v170
    %345 = vmatprep.subr.mxu0 0.0
    %346 = vmatpush2.msra.mxu0 0.0
    %347 = vmatprep.subr.mxu0 0.0
    %348 = vmatpush2.msra.mxu0 0.0
    %349 = vmatprep.subr.mxu0 0.0
    %350 = vmatpush2.msra.mxu0 0.0
    %351 = vmatprep.subr.mxu0 0.0
    %352 = vmatpush2.msra.mxu0 0.0
    %353 = vmatprep.subr.mxu0 0.0
    %354 = vmatpush2.msra.mxu0 0.0
    %355 = vmatprep.subr.mxu0 0.0
    %356 = vmatpush2.msra.mxu0 0.0
    %357 = vmatprep.subr.mxu0 0.0
    %358 = vmatpush2.msra.mxu0 0.0
    %359 = vmatprep.subr.mxu0 0.0
    %360 = vmatpush2.msra.mxu0 0.0
    %361 = vmatprep.subr.mxu0 0.0
    %362 = vmatpush2.msra.mxu0 0.0
    %363 = vmatprep.subr.mxu0 0.0
    %364 = vmatpush2.msra.mxu0 0.0
    %365 = vmatprep.subr.mxu0 0.0
    %366 = vmatpush2.msra.mxu0 0.0
    %367 = vmatprep.subr.mxu0 0.0
    %368 = vmatpush2.msra.mxu0 0.0
    %369 = vmatprep.subr.mxu0 0.0
    %370 = vmatpush2.msra.mxu0 0.0
    %371 = vmatprep.subr.mxu0 0.0
    %372 = vmatpush2.msra.mxu0 0.0
    %373 = vmatprep.subr.mxu0 0.0
    %374 = vmatpush2.msra.mxu0 %v221
    %375 = vmatprep.subr.mxu0 0.0
    %376 = vmatpush2.msra.mxu0 %v218
    %377 = vmatprep.mubr.f32.mxu0 %v240
    %378 = vmatmul.mubr.f32.gmra.mxu0 %v166
    %v379 = vpop.f32.mrf.mxu0
    %v380 = vadd.f32 %v235, %v379
    %v381 = vpop.f32.mrf.mxu0
    %382 = vdwg.mxu0
    %v383 = vmax.f32 %v309, 0.0
    %v384 = vmax.f32 %v311, 0.0
    %v385 = vmax.f32 %v380, 0.0
    %387 = vrot.lane.b32.xlu0 %v383, 120
    %v388 = vpop.permute.xlu0 %387
    %v390 = vmax.f32 %v383, %v388
    %392 = vrot.lane.b32.xlu0 %v390, 80
    %v393 = vpop.permute.xlu0 %392
    %v395 = vmax.f32 %v390, %v393
    %v396 = vld [vmem:[%s5] sm:$0xff]
    %s397 = scalar_lea.vmem %s5, 8
    %v398 = vld [vmem:[%s397] sm:$0xff]
    %400 = vrot.lane.b32.xlu0 %v395, 112
    %v401 = vpop.permute.xlu0 %400
    %vm402 = vcmask 64512
    %v403 = vsel %vm402, %v401, 0
    %405 = vmatprep.subr.mxu0 0.0
    %406 = vmatpush1.msra.mxu0 0.0
    %407 = vmatprep.subr.mxu0 0.0
    %408 = vmatpush1.msra.mxu0 0.0
    %409 = vmatprep.subr.mxu0 0.0
    %410 = vmatpush1.msra.mxu0 0.0
    %411 = vmatprep.subr.mxu0 0.0
    %412 = vmatpush1.msra.mxu0 0.0
    %413 = vmatprep.subr.mxu0 0.0
    %414 = vmatpush1.msra.mxu0 0.0
    %415 = vmatprep.subr.mxu0 0.0
    %416 = vmatpush1.msra.mxu0 0.0
    %417 = vmatprep.subr.mxu0 0.0
    %418 = vmatpush1.msra.mxu0 0.0
    %419 = vmatprep.subr.mxu0 0.0
    %420 = vmatpush1.msra.mxu0 0.0
    %421 = vmatprep.subr.mxu0 0.0
    %422 = vmatpush1.msra.mxu0 0.0
    %423 = vmatprep.subr.mxu0 0.0
    %424 = vmatpush1.msra.mxu0 0.0
    %425 = vmatprep.subr.mxu0 0.0
    %426 = vmatpush1.msra.mxu0 0.0
    %427 = vmatprep.subr.mxu0 0.0
    %428 = vmatpush1.msra.mxu0 0.0
    %429 = vmatprep.subr.mxu0 0.0
    %430 = vmatpush1.msra.mxu0 0.0
    %431 = vmatprep.subr.mxu0 0.0
    %432 = vmatpush1.msra.mxu0 0.0
    %433 = vmatprep.subr.mxu0 0.0
    %434 = vmatpush1.msra.mxu0 0.0
    %435 = vmatprep.subr.mxu0 0.0
    %436 = vmatpush1.msra.mxu0 %v398
    %437 = vmatprep.subr.mxu0 0.0
    %438 = vmatpush2.msra.mxu0 0.0
    %439 = vmatprep.subr.mxu0 0.0
    %440 = vmatpush2.msra.mxu0 0.0
    %441 = vmatprep.subr.mxu0 0.0
    %442 = vmatpush2.msra.mxu0 0.0
    %443 = vmatprep.subr.mxu0 0.0
    %444 = vmatpush2.msra.mxu0 0.0
    %445 = vmatprep.subr.mxu0 0.0
    %446 = vmatpush2.msra.mxu0 0.0
    %447 = vmatprep.subr.mxu0 0.0
    %448 = vmatpush2.msra.mxu0 0.0
    %449 = vmatprep.subr.mxu0 0.0
    %450 = vmatpush2.msra.mxu0 0.0
    %451 = vmatprep.subr.mxu0 0.0
    %452 = vmatpush2.msra.mxu0 0.0
    %453 = vmatprep.subr.mxu0 0.0
    %454 = vmatpush2.msra.mxu0 0.0
    %455 = vmatprep.subr.mxu0 0.0
    %456 = vmatpush2.msra.mxu0 0.0
    %457 = vmatprep.subr.mxu0 0.0
    %458 = vmatpush2.msra.mxu0 0.0
    %459 = vmatprep.subr.mxu0 0.0
    %460 = vmatpush2.msra.mxu0 0.0
    %461 = vmatprep.subr.mxu0 0.0
    %462 = vmatpush2.msra.mxu0 0.0
    %463 = vmatprep.subr.mxu0 0.0
    %464 = vmatpush2.msra.mxu0 0.0
    %465 = vmatprep.subr.mxu0 0.0
    %466 = vmatpush2.msra.mxu0 0.0
    %467 = vmatprep.subr.mxu0 0.0
    %468 = vmatpush2.msra.mxu0 0.0
    %469 = vmatprep.mubr.f32.mxu0 0.0
    %470 = vmatmul.mubr.f32.gmra.mxu0 %v403
    %v471 = vpop.f32.mrf.mxu0
    %v472 = vadd.f32 0.0, %v471
    %v473 = vpop.f32.mrf.mxu0
    %474 = vdwg.mxu0
    %v475 = vsel %vm402, %v395, 0
    %477 = vmatprep.subr.mxu0 0.0
    %478 = vmatpush1.msra.mxu0 0.0
    %479 = vmatprep.subr.mxu0 0.0
    %480 = vmatpush1.msra.mxu0 0.0
    %481 = vmatprep.subr.mxu0 0.0
    %482 = vmatpush1.msra.mxu0 0.0
    %483 = vmatprep.subr.mxu0 0.0
    %484 = vmatpush1.msra.mxu0 0.0
    %485 = vmatprep.subr.mxu0 0.0
    %486 = vmatpush1.msra.mxu0 0.0
    %487 = vmatprep.subr.mxu0 0.0
    %488 = vmatpush1.msra.mxu0 0.0
    %489 = vmatprep.subr.mxu0 0.0
    %490 = vmatpush1.msra.mxu0 0.0
    %491 = vmatprep.subr.mxu0 0.0
    %492 = vmatpush1.msra.mxu0 0.0
    %493 = vmatprep.subr.mxu0 0.0
    %494 = vmatpush1.msra.mxu0 0.0
    %495 = vmatprep.subr.mxu0 0.0
    %496 = vmatpush1.msra.mxu0 0.0
    %497 = vmatprep.subr.mxu0 0.0
    %498 = vmatpush1.msra.mxu0 0.0
    %499 = vmatprep.subr.mxu0 0.0
    %500 = vmatpush1.msra.mxu0 0.0
    %501 = vmatprep.subr.mxu0 0.0
    %502 = vmatpush1.msra.mxu0 0.0
    %503 = vmatprep.subr.mxu0 0.0
    %504 = vmatpush1.msra.mxu0 0.0
    %505 = vmatprep.subr.mxu0 0.0
    %506 = vmatpush1.msra.mxu0 0.0
    %507 = vmatprep.subr.mxu0 0.0
    %508 = vmatpush1.msra.mxu0 %v396
    %509 = vmatprep.subr.mxu0 0.0
    %510 = vmatpush2.msra.mxu0 0.0
    %511 = vmatprep.subr.mxu0 0.0
    %512 = vmatpush2.msra.mxu0 0.0
    %513 = vmatprep.subr.mxu0 0.0
    %514 = vmatpush2.msra.mxu0 0.0
    %515 = vmatprep.subr.mxu0 0.0
    %516 = vmatpush2.msra.mxu0 0.0
    %517 = vmatprep.subr.mxu0 0.0
    %518 = vmatpush2.msra.mxu0 0.0
    %519 = vmatprep.subr.mxu0 0.0
    %520 = vmatpush2.msra.mxu0 0.0
    %521 = vmatprep.subr.mxu0 0.0
    %522 = vmatpush2.msra.mxu0 0.0
    %523 = vmatprep.subr.mxu0 0.0
    %524 = vmatpush2.msra.mxu0 0.0
    %525 = vmatprep.subr.mxu0 0.0
    %526 = vmatpush2.msra.mxu0 0.0
    %527 = vmatprep.subr.mxu0 0.0
    %528 = vmatpush2.msra.mxu0 0.0
    %529 = vmatprep.subr.mxu0 0.0
    %530 = vmatpush2.msra.mxu0 0.0
    %531 = vmatprep.subr.mxu0 0.0
    %532 = vmatpush2.msra.mxu0 0.0
    %533 = vmatprep.subr.mxu0 0.0
    %534 = vmatpush2.msra.mxu0 0.0
    %535 = vmatprep.subr.mxu0 0.0
    %536 = vmatpush2.msra.mxu0 0.0
    %537 = vmatprep.subr.mxu0 0.0
    %538 = vmatpush2.msra.mxu0 0.0
    %539 = vmatprep.subr.mxu0 0.0
    %540 = vmatpush2.msra.mxu0 0.0
    %541 = vmatprep.mubr.f32.mxu0 0.0
    %542 = vmatmul.mubr.f32.gmra.mxu0 %v475
    %v543 = vpop.f32.mrf.mxu0
    %v544 = vadd.f32 %v472, %v543
    %v545 = vpop.f32.mrf.mxu0
    %546 = vdwg.mxu0
    %s547 = scalar_lea.vmem %s5, 16
    %v548 = vld [vmem:[%s547] sm:$0xff]
    %549 = vrot.lane.b32.xlu0 %v395, 96
    %v550 = vpop.permute.xlu0 %549
    %v551 = vsel %vm402, %v550, 0
    %553 = vmatprep.subr.mxu0 0.0
    %554 = vmatpush1.msra.mxu0 0.0
    %555 = vmatprep.subr.mxu0 0.0
    %556 = vmatpush1.msra.mxu0 0.0
    %557 = vmatprep.subr.mxu0 0.0
    %558 = vmatpush1.msra.mxu0 0.0
    %559 = vmatprep.subr.mxu0 0.0
    %560 = vmatpush1.msra.mxu0 0.0
    %561 = vmatprep.subr.mxu0 0.0
    %562 = vmatpush1.msra.mxu0 0.0
    %563 = vmatprep.subr.mxu0 0.0
    %564 = vmatpush1.msra.mxu0 0.0
    %565 = vmatprep.subr.mxu0 0.0
    %566 = vmatpush1.msra.mxu0 0.0
    %567 = vmatprep.subr.mxu0 0.0
    %568 = vmatpush1.msra.mxu0 0.0
    %569 = vmatprep.subr.mxu0 0.0
    %570 = vmatpush1.msra.mxu0 0.0
    %571 = vmatprep.subr.mxu0 0.0
    %572 = vmatpush1.msra.mxu0 0.0
    %573 = vmatprep.subr.mxu0 0.0
    %574 = vmatpush1.msra.mxu0 0.0
    %575 = vmatprep.subr.mxu0 0.0
    %576 = vmatpush1.msra.mxu0 0.0
    %577 = vmatprep.subr.mxu0 0.0
    %578 = vmatpush1.msra.mxu0 0.0
    %579 = vmatprep.subr.mxu0 0.0
    %580 = vmatpush1.msra.mxu0 0.0
    %581 = vmatprep.subr.mxu0 0.0
    %582 = vmatpush1.msra.mxu0 0.0
    %583 = vmatprep.subr.mxu0 0.0
    %584 = vmatpush1.msra.mxu0 %v548
    %585 = vmatprep.subr.mxu0 0.0
    %586 = vmatpush2.msra.mxu0 0.0
    %587 = vmatprep.subr.mxu0 0.0
    %588 = vmatpush2.msra.mxu0 0.0
    %589 = vmatprep.subr.mxu0 0.0
    %590 = vmatpush2.msra.mxu0 0.0
    %591 = vmatprep.subr.mxu0 0.0
    %592 = vmatpush2.msra.mxu0 0.0
    %593 = vmatprep.subr.mxu0 0.0
    %594 = vmatpush2.msra.mxu0 0.0
    %595 = vmatprep.subr.mxu0 0.0
    %596 = vmatpush2.msra.mxu0 0.0
    %597 = vmatprep.subr.mxu0 0.0
    %598 = vmatpush2.msra.mxu0 0.0
    %599 = vmatprep.subr.mxu0 0.0
    %600 = vmatpush2.msra.mxu0 0.0
    %601 = vmatprep.subr.mxu0 0.0
    %602 = vmatpush2.msra.mxu0 0.0
    %603 = vmatprep.subr.mxu0 0.0
    %604 = vmatpush2.msra.mxu0 0.0
    %605 = vmatprep.subr.mxu0 0.0
    %606 = vmatpush2.msra.mxu0 0.0
    %607 = vmatprep.subr.mxu0 0.0
    %608 = vmatpush2.msra.mxu0 0.0
    %609 = vmatprep.subr.mxu0 0.0
    %610 = vmatpush2.msra.mxu0 0.0
    %611 = vmatprep.subr.mxu0 0.0
    %612 = vmatpush2.msra.mxu0 0.0
    %613 = vmatprep.subr.mxu0 0.0
    %614 = vmatpush2.msra.mxu0 0.0
    %615 = vmatprep.subr.mxu0 0.0
    %616 = vmatpush2.msra.mxu0 0.0
    %617 = vmatprep.mubr.f32.mxu0 0.0
    %618 = vmatmul.mubr.f32.gmra.mxu0 %v551
    %v619 = vpop.f32.mrf.mxu0
    %v620 = vadd.f32 0.0, %v619
    %v621 = vpop.f32.mrf.mxu0
    %622 = vdwg.mxu0
    %v623 = vadd.f32 %v544, %v620
    %625 = vrot.lane.b32.xlu0 %v384, 120
    %v626 = vpop.permute.xlu0 %625
    %v628 = vmax.f32 %v384, %v626
    %630 = vrot.lane.b32.xlu0 %v628, 80
    %v631 = vpop.permute.xlu0 %630
    %v633 = vmax.f32 %v390, %v631
    %s634 = scalar_lea.vmem %s5, 24
    %v635 = vld [vmem:[%s634] sm:$0xff]
    %637 = vrot.lane.b32.xlu0 %v633, 32
    %v638 = vpop.permute.xlu0 %637
    %v639 = vsel %vm402, %v638, 0
    %641 = vmatprep.subr.mxu0 0.0
    %642 = vmatpush1.msra.mxu0 0.0
    %643 = vmatprep.subr.mxu0 0.0
    %644 = vmatpush1.msra.mxu0 0.0
    %645 = vmatprep.subr.mxu0 0.0
    %646 = vmatpush1.msra.mxu0 0.0
    %647 = vmatprep.subr.mxu0 0.0
    %648 = vmatpush1.msra.mxu0 0.0
    %649 = vmatprep.subr.mxu0 0.0
    %650 = vmatpush1.msra.mxu0 0.0
    %651 = vmatprep.subr.mxu0 0.0
    %652 = vmatpush1.msra.mxu0 0.0
    %653 = vmatprep.subr.mxu0 0.0
    %654 = vmatpush1.msra.mxu0 0.0
    %655 = vmatprep.subr.mxu0 0.0
    %656 = vmatpush1.msra.mxu0 0.0
    %657 = vmatprep.subr.mxu0 0.0
    %658 = vmatpush1.msra.mxu0 0.0
    %659 = vmatprep.subr.mxu0 0.0
    %660 = vmatpush1.msra.mxu0 0.0
    %661 = vmatprep.subr.mxu0 0.0
    %662 = vmatpush1.msra.mxu0 0.0
    %663 = vmatprep.subr.mxu0 0.0
    %664 = vmatpush1.msra.mxu0 0.0
    %665 = vmatprep.subr.mxu0 0.0
    %666 = vmatpush1.msra.mxu0 0.0
    %667 = vmatprep.subr.mxu0 0.0
    %668 = vmatpush1.msra.mxu0 0.0
    %669 = vmatprep.subr.mxu0 0.0
    %670 = vmatpush1.msra.mxu0 0.0
    %671 = vmatprep.subr.mxu0 0.0
    %672 = vmatpush1.msra.mxu0 %v635
    %673 = vmatprep.subr.mxu0 0.0
    %674 = vmatpush2.msra.mxu0 0.0
    %675 = vmatprep.subr.mxu0 0.0
    %676 = vmatpush2.msra.mxu0 0.0
    %677 = vmatprep.subr.mxu0 0.0
    %678 = vmatpush2.msra.mxu0 0.0
    %679 = vmatprep.subr.mxu0 0.0
    %680 = vmatpush2.msra.mxu0 0.0
    %681 = vmatprep.subr.mxu0 0.0
    %682 = vmatpush2.msra.mxu0 0.0
    %683 = vmatprep.subr.mxu0 0.0
    %684 = vmatpush2.msra.mxu0 0.0
    %685 = vmatprep.subr.mxu0 0.0
    %686 = vmatpush2.msra.mxu0 0.0
    %687 = vmatprep.subr.mxu0 0.0
    %688 = vmatpush2.msra.mxu0 0.0
    %689 = vmatprep.subr.mxu0 0.0
    %690 = vmatpush2.msra.mxu0 0.0
    %691 = vmatprep.subr.mxu0 0.0
    %692 = vmatpush2.msra.mxu0 0.0
    %693 = vmatprep.subr.mxu0 0.0
    %694 = vmatpush2.msra.mxu0 0.0
    %695 = vmatprep.subr.mxu0 0.0
    %696 = vmatpush2.msra.mxu0 0.0
    %697 = vmatprep.subr.mxu0 0.0
    %698 = vmatpush2.msra.mxu0 0.0
    %699 = vmatprep.subr.mxu0 0.0
    %700 = vmatpush2.msra.mxu0 0.0
    %701 = vmatprep.subr.mxu0 0.0
    %702 = vmatpush2.msra.mxu0 0.0
    %703 = vmatprep.subr.mxu0 0.0
    %704 = vmatpush2.msra.mxu0 0.0
    %705 = vmatprep.mubr.f32.mxu0 0.0
    %706 = vmatmul.mubr.f32.gmra.mxu0 %v639
    %v707 = vpop.f32.mrf.mxu0
    %v708 = vadd.f32 0.0, %v707
    %v709 = vpop.f32.mrf.mxu0
    %710 = vdwg.mxu0
    %v711 = vadd.f32 %v623, %v708
    %s712 = scalar_lea.vmem %s5, 32
    %v713 = vld [vmem:[%s712] sm:$0xff]
    %714 = vrot.lane.b32.xlu0 %v633, 16
    %v715 = vpop.permute.xlu0 %714
    %v716 = vsel %vm402, %v715, 0
    %718 = vmatprep.subr.mxu0 0.0
    %719 = vmatpush1.msra.mxu0 0.0
    %720 = vmatprep.subr.mxu0 0.0
    %721 = vmatpush1.msra.mxu0 0.0
    %722 = vmatprep.subr.mxu0 0.0
    %723 = vmatpush1.msra.mxu0 0.0
    %724 = vmatprep.subr.mxu0 0.0
    %725 = vmatpush1.msra.mxu0 0.0
    %726 = vmatprep.subr.mxu0 0.0
    %727 = vmatpush1.msra.mxu0 0.0
    %728 = vmatprep.subr.mxu0 0.0
    %729 = vmatpush1.msra.mxu0 0.0
    %730 = vmatprep.subr.mxu0 0.0
    %731 = vmatpush1.msra.mxu0 0.0
    %732 = vmatprep.subr.mxu0 0.0
    %733 = vmatpush1.msra.mxu0 0.0
    %734 = vmatprep.subr.mxu0 0.0
    %735 = vmatpush1.msra.mxu0 0.0
    %736 = vmatprep.subr.mxu0 0.0
    %737 = vmatpush1.msra.mxu0 0.0
    %738 = vmatprep.subr.mxu0 0.0
    %739 = vmatpush1.msra.mxu0 0.0
    %740 = vmatprep.subr.mxu0 0.0
    %741 = vmatpush1.msra.mxu0 0.0
    %742 = vmatprep.subr.mxu0 0.0
    %743 = vmatpush1.msra.mxu0 0.0
    %744 = vmatprep.subr.mxu0 0.0
    %745 = vmatpush1.msra.mxu0 0.0
    %746 = vmatprep.subr.mxu0 0.0
    %747 = vmatpush1.msra.mxu0 0.0
    %748 = vmatprep.subr.mxu0 0.0
    %749 = vmatpush1.msra.mxu0 %v713
    %750 = vmatprep.subr.mxu0 0.0
    %751 = vmatpush2.msra.mxu0 0.0
    %752 = vmatprep.subr.mxu0 0.0
    %753 = vmatpush2.msra.mxu0 0.0
    %754 = vmatprep.subr.mxu0 0.0
    %755 = vmatpush2.msra.mxu0 0.0
    %756 = vmatprep.subr.mxu0 0.0
    %757 = vmatpush2.msra.mxu0 0.0
    %758 = vmatprep.subr.mxu0 0.0
    %759 = vmatpush2.msra.mxu0 0.0
    %760 = vmatprep.subr.mxu0 0.0
    %761 = vmatpush2.msra.mxu0 0.0
    %762 = vmatprep.subr.mxu0 0.0
    %763 = vmatpush2.msra.mxu0 0.0
    %764 = vmatprep.subr.mxu0 0.0
    %765 = vmatpush2.msra.mxu0 0.0
    %766 = vmatprep.subr.mxu0 0.0
    %767 = vmatpush2.msra.mxu0 0.0
    %768 = vmatprep.subr.mxu0 0.0
    %769 = vmatpush2.msra.mxu0 0.0
    %770 = vmatprep.subr.mxu0 0.0
    %771 = vmatpush2.msra.mxu0 0.0
    %772 = vmatprep.subr.mxu0 0.0
    %773 = vmatpush2.msra.mxu0 0.0
    %774 = vmatprep.subr.mxu0 0.0
    %775 = vmatpush2.msra.mxu0 0.0
    %776 = vmatprep.subr.mxu0 0.0
    %777 = vmatpush2.msra.mxu0 0.0
    %778 = vmatprep.subr.mxu0 0.0
    %779 = vmatpush2.msra.mxu0 0.0
    %780 = vmatprep.subr.mxu0 0.0
    %781 = vmatpush2.msra.mxu0 0.0
    %782 = vmatprep.mubr.f32.mxu0 0.0
    %783 = vmatmul.mubr.f32.gmra.mxu0 %v716
    %v784 = vpop.f32.mrf.mxu0
    %v785 = vadd.f32 0.0, %v784
    %v786 = vpop.f32.mrf.mxu0
    %787 = vdwg.mxu0
    %v788 = vadd.f32 %v711, %v785
    %v789 = vmax.f32 %v628, %v631
    %s790 = scalar_lea.vmem %s5, 40
    %v791 = vld [vmem:[%s790] sm:$0xff]
    %v793 = vsel %vm402, %v789, 0
    %795 = vmatprep.subr.mxu0 0.0
    %796 = vmatpush1.msra.mxu0 0.0
    %797 = vmatprep.subr.mxu0 0.0
    %798 = vmatpush1.msra.mxu0 0.0
    %799 = vmatprep.subr.mxu0 0.0
    %800 = vmatpush1.msra.mxu0 0.0
    %801 = vmatprep.subr.mxu0 0.0
    %802 = vmatpush1.msra.mxu0 0.0
    %803 = vmatprep.subr.mxu0 0.0
    %804 = vmatpush1.msra.mxu0 0.0
    %805 = vmatprep.subr.mxu0 0.0
    %806 = vmatpush1.msra.mxu0 0.0
    %807 = vmatprep.subr.mxu0 0.0
    %808 = vmatpush1.msra.mxu0 0.0
    %809 = vmatprep.subr.mxu0 0.0
    %810 = vmatpush1.msra.mxu0 0.0
    %811 = vmatprep.subr.mxu0 0.0
    %812 = vmatpush1.msra.mxu0 0.0
    %813 = vmatprep.subr.mxu0 0.0
    %814 = vmatpush1.msra.mxu0 0.0
    %815 = vmatprep.subr.mxu0 0.0
    %816 = vmatpush1.msra.mxu0 0.0
    %817 = vmatprep.subr.mxu0 0.0
    %818 = vmatpush1.msra.mxu0 0.0
    %819 = vmatprep.subr.mxu0 0.0
    %820 = vmatpush1.msra.mxu0 0.0
    %821 = vmatprep.subr.mxu0 0.0
    %822 = vmatpush1.msra.mxu0 0.0
    %823 = vmatprep.subr.mxu0 0.0
    %824 = vmatpush1.msra.mxu0 0.0
    %825 = vmatprep.subr.mxu0 0.0
    %826 = vmatpush1.msra.mxu0 %v791
    %827 = vmatprep.subr.mxu0 0.0
    %828 = vmatpush2.msra.mxu0 0.0
    %829 = vmatprep.subr.mxu0 0.0
    %830 = vmatpush2.msra.mxu0 0.0
    %831 = vmatprep.subr.mxu0 0.0
    %832 = vmatpush2.msra.mxu0 0.0
    %833 = vmatprep.subr.mxu0 0.0
    %834 = vmatpush2.msra.mxu0 0.0
    %835 = vmatprep.subr.mxu0 0.0
    %836 = vmatpush2.msra.mxu0 0.0
    %837 = vmatprep.subr.mxu0 0.0
    %838 = vmatpush2.msra.mxu0 0.0
    %839 = vmatprep.subr.mxu0 0.0
    %840 = vmatpush2.msra.mxu0 0.0
    %841 = vmatprep.subr.mxu0 0.0
    %842 = vmatpush2.msra.mxu0 0.0
    %843 = vmatprep.subr.mxu0 0.0
    %844 = vmatpush2.msra.mxu0 0.0
    %845 = vmatprep.subr.mxu0 0.0
    %846 = vmatpush2.msra.mxu0 0.0
    %847 = vmatprep.subr.mxu0 0.0
    %848 = vmatpush2.msra.mxu0 0.0
    %849 = vmatprep.subr.mxu0 0.0
    %850 = vmatpush2.msra.mxu0 0.0
    %851 = vmatprep.subr.mxu0 0.0
    %852 = vmatpush2.msra.mxu0 0.0
    %853 = vmatprep.subr.mxu0 0.0
    %854 = vmatpush2.msra.mxu0 0.0
    %855 = vmatprep.subr.mxu0 0.0
    %856 = vmatpush2.msra.mxu0 0.0
    %857 = vmatprep.subr.mxu0 0.0
    %858 = vmatpush2.msra.mxu0 0.0
    %859 = vmatprep.mubr.f32.mxu0 0.0
    %860 = vmatmul.mubr.f32.gmra.mxu0 %v793
    %v861 = vpop.f32.mrf.mxu0
    %v862 = vadd.f32 0.0, %v861
    %v863 = vpop.f32.mrf.mxu0
    %864 = vdwg.mxu0
    %v865 = vadd.f32 %v788, %v862
    %s866 = scalar_lea.vmem %s5, 48
    %v867 = vld [vmem:[%s866] sm:$0xff]
    %868 = vrot.lane.b32.xlu0 %v789, 64
    %v869 = vpop.permute.xlu0 %868
    %v870 = vsel %vm402, %v869, 0
    %872 = vmatprep.subr.mxu0 0.0
    %873 = vmatpush1.msra.mxu0 0.0
    %874 = vmatprep.subr.mxu0 0.0
    %875 = vmatpush1.msra.mxu0 0.0
    %876 = vmatprep.subr.mxu0 0.0
    %877 = vmatpush1.msra.mxu0 0.0
    %878 = vmatprep.subr.mxu0 0.0
    %879 = vmatpush1.msra.mxu0 0.0
    %880 = vmatprep.subr.mxu0 0.0
    %881 = vmatpush1.msra.mxu0 0.0
    %882 = vmatprep.subr.mxu0 0.0
    %883 = vmatpush1.msra.mxu0 0.0
    %884 = vmatprep.subr.mxu0 0.0
    %885 = vmatpush1.msra.mxu0 0.0
    %886 = vmatprep.subr.mxu0 0.0
    %887 = vmatpush1.msra.mxu0 0.0
    %888 = vmatprep.subr.mxu0 0.0
    %889 = vmatpush1.msra.mxu0 0.0
    %890 = vmatprep.subr.mxu0 0.0
    %891 = vmatpush1.msra.mxu0 0.0
    %892 = vmatprep.subr.mxu0 0.0
    %893 = vmatpush1.msra.mxu0 0.0
    %894 = vmatprep.subr.mxu0 0.0
    %895 = vmatpush1.msra.mxu0 0.0
    %896 = vmatprep.subr.mxu0 0.0
    %897 = vmatpush1.msra.mxu0 0.0
    %898 = vmatprep.subr.mxu0 0.0
    %899 = vmatpush1.msra.mxu0 0.0
    %900 = vmatprep.subr.mxu0 0.0
    %901 = vmatpush1.msra.mxu0 0.0
    %902 = vmatprep.subr.mxu0 0.0
    %903 = vmatpush1.msra.mxu0 %v867
    %904 = vmatprep.subr.mxu0 0.0
    %905 = vmatpush2.msra.mxu0 0.0
    %906 = vmatprep.subr.mxu0 0.0
    %907 = vmatpush2.msra.mxu0 0.0
    %908 = vmatprep.subr.mxu0 0.0
    %909 = vmatpush2.msra.mxu0 0.0
    %910 = vmatprep.subr.mxu0 0.0
    %911 = vmatpush2.msra.mxu0 0.0
    %912 = vmatprep.subr.mxu0 0.0
    %913 = vmatpush2.msra.mxu0 0.0
    %914 = vmatprep.subr.mxu0 0.0
    %915 = vmatpush2.msra.mxu0 0.0
    %916 = vmatprep.subr.mxu0 0.0
    %917 = vmatpush2.msra.mxu0 0.0
    %918 = vmatprep.subr.mxu0 0.0
    %919 = vmatpush2.msra.mxu0 0.0
    %920 = vmatprep.subr.mxu0 0.0
    %921 = vmatpush2.msra.mxu0 0.0
    %922 = vmatprep.subr.mxu0 0.0
    %923 = vmatpush2.msra.mxu0 0.0
    %924 = vmatprep.subr.mxu0 0.0
    %925 = vmatpush2.msra.mxu0 0.0
    %926 = vmatprep.subr.mxu0 0.0
    %927 = vmatpush2.msra.mxu0 0.0
    %928 = vmatprep.subr.mxu0 0.0
    %929 = vmatpush2.msra.mxu0 0.0
    %930 = vmatprep.subr.mxu0 0.0
    %931 = vmatpush2.msra.mxu0 0.0
    %932 = vmatprep.subr.mxu0 0.0
    %933 = vmatpush2.msra.mxu0 0.0
    %934 = vmatprep.subr.mxu0 0.0
    %935 = vmatpush2.msra.mxu0 0.0
    %936 = vmatprep.mubr.f32.mxu0 0.0
    %937 = vmatmul.mubr.f32.gmra.mxu0 %v870
    %v938 = vpop.f32.mrf.mxu0
    %v939 = vadd.f32 0.0, %v938
    %v940 = vpop.f32.mrf.mxu0
    %941 = vdwg.mxu0
    %v942 = vadd.f32 %v865, %v939
    %944 = vrot.lane.b32.xlu0 %v385, 120
    %v945 = vpop.permute.xlu0 %944
    %v947 = vmax.f32 %v385, %v945
    %949 = vrot.lane.b32.xlu0 %v947, 80
    %v950 = vpop.permute.xlu0 %949
    %v952 = vmax.f32 %v628, %v950
    %s953 = scalar_lea.vmem %s5, 56
    %v954 = vld [vmem:[%s953] sm:$0xff]
    %956 = vrot.lane.b32.xlu0 %v952, 48
    %v957 = vpop.permute.xlu0 %956
    %v958 = vsel %vm402, %v957, 0
    %960 = vmatprep.subr.mxu0 0.0
    %961 = vmatpush1.msra.mxu0 0.0
    %962 = vmatprep.subr.mxu0 0.0
    %963 = vmatpush1.msra.mxu0 0.0
    %964 = vmatprep.subr.mxu0 0.0
    %965 = vmatpush1.msra.mxu0 0.0
    %966 = vmatprep.subr.mxu0 0.0
    %967 = vmatpush1.msra.mxu0 0.0
    %968 = vmatprep.subr.mxu0 0.0
    %969 = vmatpush1.msra.mxu0 0.0
    %970 = vmatprep.subr.mxu0 0.0
    %971 = vmatpush1.msra.mxu0 0.0
    %972 = vmatprep.subr.mxu0 0.0
    %973 = vmatpush1.msra.mxu0 0.0
    %974 = vmatprep.subr.mxu0 0.0
    %975 = vmatpush1.msra.mxu0 0.0
    %976 = vmatprep.subr.mxu0 0.0
    %977 = vmatpush1.msra.mxu0 0.0
    %978 = vmatprep.subr.mxu0 0.0
    %979 = vmatpush1.msra.mxu0 0.0
    %980 = vmatprep.subr.mxu0 0.0
    %981 = vmatpush1.msra.mxu0 0.0
    %982 = vmatprep.subr.mxu0 0.0
    %983 = vmatpush1.msra.mxu0 0.0
    %984 = vmatprep.subr.mxu0 0.0
    %985 = vmatpush1.msra.mxu0 0.0
    %986 = vmatprep.subr.mxu0 0.0
    %987 = vmatpush1.msra.mxu0 0.0
    %988 = vmatprep.subr.mxu0 0.0
    %989 = vmatpush1.msra.mxu0 0.0
    %990 = vmatprep.subr.mxu0 0.0
    %991 = vmatpush1.msra.mxu0 %v954
    %992 = vmatprep.subr.mxu0 0.0
    %993 = vmatpush2.msra.mxu0 0.0
    %994 = vmatprep.subr.mxu0 0.0
    %995 = vmatpush2.msra.mxu0 0.0
    %996 = vmatprep.subr.mxu0 0.0
    %997 = vmatpush2.msra.mxu0 0.0
    %998 = vmatprep.subr.mxu0 0.0
    %999 = vmatpush2.msra.mxu0 0.0
    %1000 = vmatprep.subr.mxu0 0.0
    %1001 = vmatpush2.msra.mxu0 0.0
    %1002 = vmatprep.subr.mxu0 0.0
    %1003 = vmatpush2.msra.mxu0 0.0
    %1004 = vmatprep.subr.mxu0 0.0
    %1005 = vmatpush2.msra.mxu0 0.0
    %1006 = vmatprep.subr.mxu0 0.0
    %1007 = vmatpush2.msra.mxu0 0.0
    %1008 = vmatprep.subr.mxu0 0.0
    %1009 = vmatpush2.msra.mxu0 0.0
    %1010 = vmatprep.subr.mxu0 0.0
    %1011 = vmatpush2.msra.mxu0 0.0
    %1012 = vmatprep.subr.mxu0 0.0
    %1013 = vmatpush2.msra.mxu0 0.0
    %1014 = vmatprep.subr.mxu0 0.0
    %1015 = vmatpush2.msra.mxu0 0.0
    %1016 = vmatprep.subr.mxu0 0.0
    %1017 = vmatpush2.msra.mxu0 0.0
    %1018 = vmatprep.subr.mxu0 0.0
    %1019 = vmatpush2.msra.mxu0 0.0
    %1020 = vmatprep.subr.mxu0 0.0
    %1021 = vmatpush2.msra.mxu0 0.0
    %1022 = vmatprep.subr.mxu0 0.0
    %1023 = vmatpush2.msra.mxu0 0.0
    %1024 = vmatprep.mubr.f32.mxu0 0.0
    %1025 = vmatmul.mubr.f32.gmra.mxu0 %v958
    %v1026 = vpop.f32.mrf.mxu0
    %v1027 = vadd.f32 0.0, %v1026
    %v1028 = vpop.f32.mrf.mxu0
    %1029 = vdwg.mxu0
    %v1030 = vadd.f32 %v942, %v1027
    %s1031 = scalar_lea.vmem %s5, 64
    %v1032 = vld [vmem:[%s1031] sm:$0xff]
    %1033 = vrot.lane.b32.xlu0 %v952, 32
    %v1034 = vpop.permute.xlu0 %1033
    %v1035 = vsel %vm402, %v1034, 0
    %1037 = vmatprep.subr.mxu0 0.0
    %1038 = vmatpush1.msra.mxu0 0.0
    %1039 = vmatprep.subr.mxu0 0.0
    %1040 = vmatpush1.msra.mxu0 0.0
    %1041 = vmatprep.subr.mxu0 0.0
    %1042 = vmatpush1.msra.mxu0 0.0
    %1043 = vmatprep.subr.mxu0 0.0
    %1044 = vmatpush1.msra.mxu0 0.0
    %1045 = vmatprep.subr.mxu0 0.0
    %1046 = vmatpush1.msra.mxu0 0.0
    %1047 = vmatprep.subr.mxu0 0.0
    %1048 = vmatpush1.msra.mxu0 0.0
    %1049 = vmatprep.subr.mxu0 0.0
    %1050 = vmatpush1.msra.mxu0 0.0
    %1051 = vmatprep.subr.mxu0 0.0
    %1052 = vmatpush1.msra.mxu0 0.0
    %1053 = vmatprep.subr.mxu0 0.0
    %1054 = vmatpush1.msra.mxu0 0.0
    %1055 = vmatprep.subr.mxu0 0.0
    %1056 = vmatpush1.msra.mxu0 0.0
    %1057 = vmatprep.subr.mxu0 0.0
    %1058 = vmatpush1.msra.mxu0 0.0
    %1059 = vmatprep.subr.mxu0 0.0
    %1060 = vmatpush1.msra.mxu0 0.0
    %1061 = vmatprep.subr.mxu0 0.0
    %1062 = vmatpush1.msra.mxu0 0.0
    %1063 = vmatprep.subr.mxu0 0.0
    %1064 = vmatpush1.msra.mxu0 0.0
    %1065 = vmatprep.subr.mxu0 0.0
    %1066 = vmatpush1.msra.mxu0 0.0
    %1067 = vmatprep.subr.mxu0 0.0
    %1068 = vmatpush1.msra.mxu0 %v1032
    %1069 = vmatprep.subr.mxu0 0.0
    %1070 = vmatpush2.msra.mxu0 0.0
    %1071 = vmatprep.subr.mxu0 0.0
    %1072 = vmatpush2.msra.mxu0 0.0
    %1073 = vmatprep.subr.mxu0 0.0
    %1074 = vmatpush2.msra.mxu0 0.0
    %1075 = vmatprep.subr.mxu0 0.0
    %1076 = vmatpush2.msra.mxu0 0.0
    %1077 = vmatprep.subr.mxu0 0.0
    %1078 = vmatpush2.msra.mxu0 0.0
    %1079 = vmatprep.subr.mxu0 0.0
    %1080 = vmatpush2.msra.mxu0 0.0
    %1081 = vmatprep.subr.mxu0 0.0
    %1082 = vmatpush2.msra.mxu0 0.0
    %1083 = vmatprep.subr.mxu0 0.0
    %1084 = vmatpush2.msra.mxu0 0.0
    %1085 = vmatprep.subr.mxu0 0.0
    %1086 = vmatpush2.msra.mxu0 0.0
    %1087 = vmatprep.subr.mxu0 0.0
    %1088 = vmatpush2.msra.mxu0 0.0
    %1089 = vmatprep.subr.mxu0 0.0
    %1090 = vmatpush2.msra.mxu0 0.0
    %1091 = vmatprep.subr.mxu0 0.0
    %1092 = vmatpush2.msra.mxu0 0.0
    %1093 = vmatprep.subr.mxu0 0.0
    %1094 = vmatpush2.msra.mxu0 0.0
    %1095 = vmatprep.subr.mxu0 0.0
    %1096 = vmatpush2.msra.mxu0 0.0
    %1097 = vmatprep.subr.mxu0 0.0
    %1098 = vmatpush2.msra.mxu0 0.0
    %1099 = vmatprep.subr.mxu0 0.0
    %1100 = vmatpush2.msra.mxu0 0.0
    %1101 = vmatprep.mubr.f32.mxu0 0.0
    %1102 = vmatmul.mubr.f32.gmra.mxu0 %v1035
    %v1103 = vpop.f32.mrf.mxu0
    %v1104 = vadd.f32 0.0, %v1103
    %v1105 = vpop.f32.mrf.mxu0
    %1106 = vdwg.mxu0
    %v1107 = vadd.f32 %v1030, %v1104
    %v1108 = vld [vmem:[%s6] sm:$0x1]
    %v1110 = vlaneseq
    %v1111 = vshrl.u32 %v1110, 7
    %v1112 = vsub.s32 0, %v1111
    %v1113 = vrot.slane %v1108, %v1112
    %v1115 = vadd.f32 %v1107, %v1113
    %v1116 = vmax.f32 %v1115, 0.0
    %v1117 = vld [vmem:[%s7] sm:$0xff]
    %v1118 = vld [vmem:[%s7 + $0x8] sm:$0xff]
    %v1119 = vld [vmem:[%s7 + $0x10] sm:$0xff]
    %v1120 = vld [vmem:[%s7 + $0x18] sm:$0xff]
    %v1121 = vld [vmem:[%s7 + $0x20] sm:$0xf]
    %v1122 = vld [vmem:[%s8] sm:$0x1]
    %v1124 = vlaneseq
    %v1125 = vshrl.u32 %v1124, 7
    %v1126 = vsub.s32 0, %v1125
    %v1127 = vrot.slane %v1122, %v1126
    %vm1129 = vcmask 293888
    %v1131 = vsel %vm1129, %v1116, 0
    %vm1133 = vcmask 1043456
    %v1135 = vsel %vm1133, %v1121, 0
    %1137 = vmatprep.subr.mxu0 0.0
    %1138 = vmatpush1.msra.mxu0 0.0
    %1139 = vmatprep.subr.mxu0 0.0
    %1140 = vmatpush1.msra.mxu0 0.0
    %1141 = vmatprep.subr.mxu0 0.0
    %1142 = vmatpush1.msra.mxu0 0.0
    %1143 = vmatprep.subr.mxu0 0.0
    %1144 = vmatpush1.msra.mxu0 0.0
    %1145 = vmatprep.subr.mxu0 0.0
    %1146 = vmatpush1.msra.mxu0 0.0
    %1147 = vmatprep.subr.mxu0 0.0
    %1148 = vmatpush1.msra.mxu0 0.0
    %1149 = vmatprep.subr.mxu0 0.0
    %1150 = vmatpush1.msra.mxu0 0.0
    %1151 = vmatprep.subr.mxu0 0.0
    %1152 = vmatpush1.msra.mxu0 0.0
    %1153 = vmatprep.subr.mxu0 0.0
    %1154 = vmatpush1.msra.mxu0 0.0
    %1155 = vmatprep.subr.mxu0 0.0
    %1156 = vmatpush1.msra.mxu0 0.0
    %1157 = vmatprep.subr.mxu0 0.0
    %1158 = vmatpush1.msra.mxu0 0.0
    %1159 = vmatprep.subr.mxu0 0.0
    %1160 = vmatpush1.msra.mxu0 %v1135
    %1161 = vmatprep.subr.mxu0 0.0
    %1162 = vmatpush1.msra.mxu0 %v1120
    %1163 = vmatprep.subr.mxu0 0.0
    %1164 = vmatpush1.msra.mxu0 %v1119
    %1165 = vmatprep.subr.mxu0 0.0
    %1166 = vmatpush1.msra.mxu0 %v1118
    %1167 = vmatprep.subr.mxu0 0.0
    %1168 = vmatpush1.msra.mxu0 %v1117
    %1169 = vmatprep.subr.mxu0 0.0
    %1170 = vmatpush2.msra.mxu0 0.0
    %1171 = vmatprep.subr.mxu0 0.0
    %1172 = vmatpush2.msra.mxu0 0.0
    %1173 = vmatprep.subr.mxu0 0.0
    %1174 = vmatpush2.msra.mxu0 0.0
    %1175 = vmatprep.subr.mxu0 0.0
    %1176 = vmatpush2.msra.mxu0 0.0
    %1177 = vmatprep.subr.mxu0 0.0
    %1178 = vmatpush2.msra.mxu0 0.0
    %1179 = vmatprep.subr.mxu0 0.0
    %1180 = vmatpush2.msra.mxu0 0.0
    %1181 = vmatprep.subr.mxu0 0.0
    %1182 = vmatpush2.msra.mxu0 0.0
    %1183 = vmatprep.subr.mxu0 0.0
    %1184 = vmatpush2.msra.mxu0 0.0
    %1185 = vmatprep.subr.mxu0 0.0
    %1186 = vmatpush2.msra.mxu0 0.0
    %1187 = vmatprep.subr.mxu0 0.0
    %1188 = vmatpush2.msra.mxu0 0.0
    %1189 = vmatprep.subr.mxu0 0.0
    %1190 = vmatpush2.msra.mxu0 0.0
    %1191 = vmatprep.subr.mxu0 0.0
    %1192 = vmatpush2.msra.mxu0 0.0
    %1193 = vmatprep.subr.mxu0 0.0
    %1194 = vmatpush2.msra.mxu0 0.0
    %1195 = vmatprep.subr.mxu0 0.0
    %1196 = vmatpush2.msra.mxu0 0.0
    %1197 = vmatprep.subr.mxu0 0.0
    %1198 = vmatpush2.msra.mxu0 0.0
    %1199 = vmatprep.subr.mxu0 0.0
    %1200 = vmatpush2.msra.mxu0 0.0
    %1201 = vmatprep.mubr.f32.mxu0 0.0
    %1202 = vmatmul.mubr.f32.gmra.mxu0 %v1131
    %v1203 = vpop.f32.mrf.mxu0
    %v1204 = vadd.f32 %v1127, %v1203
    %v1205 = vpop.f32.mrf.mxu0
    %1206 = vdwg.mxu0
    %1207 = vst [vmem:[#allocation2] sm:$0x3] %v1204
    // Predicated region
    $region38: #{classic_net_forward.1} parent=1 // pred_check
      _
    $region39: #{classic_net_forward.1} parent=1 // pred_check_branch
      %1209 = sbr.rel (0) target = $region41
    $region40: #{classic_net_forward.1} parent=1 // pred_region
      %s1211 = ssub.s32 32, 32
      %1212 = vsyncadd [#allocation3], %s1211
      %s1214 = sshll.u32 [#allocation2], 4
      %s1215 = int_to_ptr.vmem [resolvable:$true] %s1214
      %1217 = dma.vmem_to_hbm [thread:$0]  %s1215, 32, %s9, [#allocation3]
    $region41: #{classic_net_forward.1} parent=1 // pred_fallthru
      _
    // Predicated region
    $region42: #{classic_net_forward.1} parent=1 // pred_check
      _
    $region43: #{classic_net_forward.1} parent=1 // pred_check_branch
      %1219 = sbr.rel (0) target = $region45
    $region44: #{classic_net_forward.1} parent=1 // pred_region
      %1220 = dma.done [#allocation3], 32
    $region45: #{classic_net_forward.1} parent=1 // pred_fallthru
      _
    %1221 = vsyncpa [#allocation3], 1

</llo_original>
